<compile_context>
chip_gen: v7x
topology: tpu7x:2x2x1
jax: 0.10.0
libtpu: 0.0.40
codegen_flags: <defaults>
</compile_context>

<pallas_src>
import jax
import jax.numpy as jnp
from jax.experimental import pallas as pl
from jax.experimental.pallas import tpu as pltpu


def _raptors_perceptron_kernel(x_ref, w1_ref, b1_ref,
                               w2r_ref, b2r_ref, w2g_ref, b2g_ref, o_ref):
    # x_ref:   [TM, H]
    # w1_ref:  [H, BOTTLE]    b1_ref:  [1, BOTTLE]
    # w2r_ref: [BOTTLE, H]    b2r_ref: [1, H]
    # w2g_ref: [1, BOTTLE]    b2g_ref: [1, 1]  (SMEM scalar)
    # o_ref:   [TM, H]
    x = x_ref[...]

    # First linear + ReLU (MXU matmul, native-dtype operands, f32 accumulation).
    h = jnp.dot(x, w1_ref[...], preferred_element_type=jnp.float32)
    h = jnp.maximum(h + b1_ref[...].astype(jnp.float32), 0.0)        # [TM, BOTTLE] f32

    # Rep and gate both consume the same (possibly low-precision) rounding of h,
    # matching the single Linear(bottle -> H+1) of the PyTorch module.
    h_lo = h.astype(w2r_ref.dtype)

    # Lane-dense representation projection: [TM, H].
    rep = jnp.dot(h_lo, w2r_ref[...], preferred_element_type=jnp.float32)
    rep = rep + b2r_ref[...].astype(jnp.float32)

    # Gate logit: VPU multiply + XLU row-reduce (avoids an H+1-wide padded matmul).
    g = jnp.sum(h_lo.astype(jnp.float32) * w2g_ref[...].astype(jnp.float32),
                axis=-1, keepdims=True)
    g = g + b2g_ref[0, 0]                                             # scalar bias (SMEM)

    # Exact sigmoid: exp on the EUP, exact divide (the approx reciprocal was the
    # source of the previous >1e-3 error).
    gate = 1.0 / (1.0 + jnp.exp(-g))                                  # [TM, 1]

    o_ref[...] = (gate * rep).astype(o_ref.dtype)


def _vmem_capacity_bytes():
    try:
        return int(pltpu.get_tpu_info().vmem_capacity_bytes)
    except Exception:
        return 64 * 1024 * 1024   # conservative (v7x-sized) fallback


def _choose_tiling(M, H, bottle, x_itemsize, w_itemsize):
    """Per-generation VMEM budget -> (row tile, vmem_limit_bytes)."""
    vmem_cap = _vmem_capacity_bytes()
    # Leave headroom for compiler-internal scratch: ~112 MiB on v5e/v6e
    # (128 MiB physical), ~48 MiB on v7x (64 MiB physical).
    vmem_limit = max(32 * 1024 * 1024,
                     min(vmem_cap - 16 * 1024 * 1024, 112 * 1024 * 1024))

    # Resident, single-buffered weights/biases.
    weight_bytes = (H * bottle + bottle * H + bottle) * w_itemsize + (bottle + H) * 4
    # Per-row cost: double-buffered x/out tiles + f32 intermediates (h, rep, temp).
    per_row = 2 * H * x_itemsize + 2 * H * x_itemsize + bottle * 4 + 2 * H * 4

    budget = int(vmem_limit * 0.75)
    tm_cap = (budget - weight_bytes) // max(per_row, 1)
    tm_cap = max(8, min(int(tm_cap), 2048))
    tm_cap = max(8, (tm_cap // 8) * 8)

    if M <= tm_cap:
        tm = M
        # Guarantee >= 2 grid steps so "parallel" rows shard across both
        # TensorCores on v7x (harmless on single-TC v5e/v6e).
        if M >= 16:
            half = ((pl.cdiv(M, 2) + 7) // 8) * 8
            if half < M:
                tm = half
    else:
        tm = tm_cap
    return tm, vmem_limit


def raptors_perceptron_forward(x, w1, b1, w2_rep, b2_rep, w2_gate, b2_gate):
    """x: [B, S, H] -> [B, S, H] (tied add_weights perceptron forward)."""
    B, S, H = x.shape
    M = B * S
    bottle = w1.shape[1]
    x2d = x.reshape(M, H)

    tm, vmem_limit = _choose_tiling(M, H, bottle,
                                    jnp.dtype(x.dtype).itemsize,
                                    jnp.dtype(w1.dtype).itemsize)
    grid = (pl.cdiv(M, tm),)

    weight_bytes = (w1.nbytes + b1.nbytes + w2_rep.nbytes + b2_rep.nbytes
                    + w2_gate.nbytes + b2_gate.nbytes)
    cost = pl.CostEstimate(
        flops=2 * M * H * bottle + 2 * M * bottle * H + 2 * M * bottle,
        transcendentals=M,
        bytes_accessed=int(2 * M * H * jnp.dtype(x.dtype).itemsize + weight_bytes),
    )

    def build(single_buffer_weights):
        def resident(shape):
            idx = lambda m: (0,) * len(shape)
            if single_buffer_weights:
                # Constant index_map -> double buffering only doubles the VMEM
                # held by the weights; keep them single-buffered.
                return pl.BlockSpec(shape, idx, pipeline_mode=pl.Buffered(1))
            return pl.BlockSpec(shape, idx)

        return pl.pallas_call(
            _raptors_perceptron_kernel,
            out_shape=jax.ShapeDtypeStruct((M, H), x.dtype),
            grid=grid,
            in_specs=[
                pl.BlockSpec((tm, H), lambda m: (m, 0)),            # x rows (pipelined)
                resident((H, bottle)),                               # w1
                resident((1, bottle)),                               # b1
                resident((bottle, H)),                               # w2_rep
                resident((1, H)),                                    # b2_rep
                resident((1, bottle)),                               # w2_gate
                pl.BlockSpec(memory_space=pltpu.MemorySpace.SMEM),   # b2_gate scalar
            ],
            out_specs=pl.BlockSpec((tm, H), lambda m: (m, 0)),
            compiler_params=pltpu.CompilerParams(
                dimension_semantics=("parallel",),
                vmem_limit_bytes=vmem_limit,
            ),
            cost_estimate=cost,
        )

    args = (x2d, w1, b1, w2_rep, b2_rep, w2_gate, b2_gate)
    try:
        out2d = build(True)(*args)
    except Exception:
        # Fallback for jax versions without BlockSpec(pipeline_mode=pl.Buffered(...)).
        out2d = build(False)(*args)

    return out2d.reshape(B, S, H)


def xavier_normal(key, shape):
    # torch.nn.init.xavier_normal_ on a Linear weight [out, in]:
    # std = sqrt(2 / (fan_in + fan_out)). `shape` here is already [in, out]
    # (transposed for x @ W), so fan_in + fan_out = sum(shape).
    fan_in, fan_out = shape
    std = (2.0 / (fan_in + fan_out)) ** 0.5
    return std * jax.random.normal(key, shape, dtype=jnp.float32)


def init_raptors_params(key, num_langs, num_layers, hidden_size, bottle_size,
                        dtype=jnp.float32):
    """Xavier-normal weights, zero biases (matches init_weights).

    The second Linear(bottle -> H+1) is stored pre-split into a lane-dense rep
    projection [bottle, H] and a gate row [1, bottle] (+ biases) so the kernel
    never touches an H+1-wide layout.
    """
    nets = []
    for _ in range(num_langs * num_layers):
        k1, k2, key = jax.random.split(key, 3)
        w1 = xavier_normal(k1, (hidden_size, bottle_size)).astype(dtype)
        b1 = jnp.zeros((1, bottle_size), dtype=jnp.float32)
        w2_full = xavier_normal(k2, (bottle_size, hidden_size + 1))     # tied head
        w2_rep = w2_full[:, :hidden_size].astype(dtype)                 # [bottle, H]
        w2_gate = w2_full[:, hidden_size:].T.astype(dtype)              # [1, bottle]
        b2_rep = jnp.zeros((1, hidden_size), dtype=jnp.float32)
        b2_gate = jnp.zeros((1, 1), dtype=jnp.float32)
        nets.append((w1, b1, w2_rep, b2_rep, w2_gate, b2_gate))
    alpha = jnp.zeros((num_langs, num_layers), dtype=jnp.float32)       # unused in forward
    return nets, alpha


def raptors_forward(nets, i, j, x, num_layers):
    ind = i * num_layers + j
    w1, b1, w2_rep, b2_rep, w2_gate, b2_gate = nets[ind]
    return raptors_perceptron_forward(x, w1, b1, w2_rep, b2_rep, w2_gate, b2_gate)


if __name__ == "__main__":
    # Full-precision matmuls for the f32 reference (the TPU default bf16-pass
    # matmul in the reference was a large part of the previous ~2e-3 mismatch).
    jax.config.update("jax_default_matmul_precision", "highest")

    # Small shapes consistent with the module's forward.
    B, S, H = 2, 8, 32
    bottle_size = 64
    num_langs, num_layers = 2, 2

    key = jax.random.PRNGKey(0)
    kx, kp = jax.random.split(key)

    x = jax.random.normal(kx, (B, S, H), dtype=jnp.float32)
    nets, alpha = init_raptors_params(kp, num_langs, num_layers, H, bottle_size)

    i, j = 1, 0
    out = raptors_forward(nets, i, j, x, num_layers)
    out = jax.block_until_ready(out)

    # Pure-JAX reference of the original (fused H+1) math.
    w1, b1, w2_rep, b2_rep, w2_gate, b2_gate = nets[i * num_layers + j]
    w2 = jnp.concatenate([w2_rep, w2_gate.T], axis=1)      # [bottle, H+1]
    b2 = jnp.concatenate([b2_rep, b2_gate], axis=1)        # [1, H+1]
    h_ref = jnp.maximum(x @ w1 + b1[0], 0.0)
    o2 = h_ref @ w2 + b2[0]
    ref = jax.nn.sigmoid(o2[..., -1])[..., None] * o2[..., :-1]

    assert out.shape == (B, S, H)
    assert bool(jnp.all(jnp.isfinite(out)))
    err = float(jnp.max(jnp.abs(out - ref)))
    assert jnp.allclose(out, ref, atol=2e-3, rtol=2e-3), err

    print("KERNEL_OK")
</pallas_src>

<mosaic_0001>
module attributes {stable_mosaic.version = 11 : i64} {
  func.func @_raptors_perceptron_kernel(%arg0: i32, %arg1: memref<8x32xf32, #tpu.memory_space<vmem>>, %arg2: memref<32x64xf32, #tpu.memory_space<vmem>>, %arg3: memref<1x64xf32, #tpu.memory_space<vmem>>, %arg4: memref<64x32xf32, #tpu.memory_space<vmem>>, %arg5: memref<1x32xf32, #tpu.memory_space<vmem>>, %arg6: memref<1x64xf32, #tpu.memory_space<vmem>>, %arg7: memref<1x1xf32, #tpu.memory_space<smem>>, %arg8: memref<8x32xf32, #tpu.memory_space<vmem>>) attributes {dimension_semantics = [#tpu.dimension_semantics<parallel>], iteration_bounds = array<i64: 2>, scalar_prefetch = 0 : i64, scratch_operands = 0 : i64, tpu.core_type = #tpu.core_type<tc>, window_params = [{transform_indices = @transform_0, window_bounds = array<i64: 8, 32>}, {pipeline_mode = #tpu.pipeline_mode<synchronous>, transform_indices = @transform_1, window_bounds = array<i64: 32, 64>}, {pipeline_mode = #tpu.pipeline_mode<synchronous>, transform_indices = @transform_2, window_bounds = array<i64: 1, 64>}, {pipeline_mode = #tpu.pipeline_mode<synchronous>, transform_indices = @transform_3, window_bounds = array<i64: 64, 32>}, {pipeline_mode = #tpu.pipeline_mode<synchronous>, transform_indices = @transform_4, window_bounds = array<i64: 1, 32>}, {pipeline_mode = #tpu.pipeline_mode<synchronous>, transform_indices = @transform_5, window_bounds = array<i64: 1, 64>}, {transform_indices = @transform_6, window_bounds = array<i64: 1, 1>}, {transform_indices = @transform_7, window_bounds = array<i64: 8, 32>}]} {
    %c0 = arith.constant 0 : index
    %c0_0 = arith.constant 0 : index
    %0 = vector.load %arg1[%c0, %c0_0] : memref<8x32xf32, #tpu.memory_space<vmem>>, vector<8x32xf32>
    %c0_1 = arith.constant 0 : index
    %c0_2 = arith.constant 0 : index
    %1 = vector.load %arg2[%c0_1, %c0_2] : memref<32x64xf32, #tpu.memory_space<vmem>>, vector<32x64xf32>
    %cst = arith.constant dense<0.000000e+00> : vector<8x64xf32>
    %2 = tpu.matmul %0, %1, %cst {dimension_numbers = #tpu.dot_dimension_numbers<[1], [0], [0], [1], [0, 0, 1, 1], [], []>, precision = #tpu.contract_precision<fp32>} : vector<8x32xf32>, vector<32x64xf32>, vector<8x64xf32> -> vector<8x64xf32>
    %c0_3 = arith.constant 0 : index
    %c0_4 = arith.constant 0 : index
    %3 = vector.load %arg3[%c0_3, %c0_4] : memref<1x64xf32, #tpu.memory_space<vmem>>, vector<1x64xf32>
    %4 = vector.broadcast %3 : vector<1x64xf32> to vector<8x64xf32>
    %5 = arith.addf %2, %4 : vector<8x64xf32>
    %cst_5 = arith.constant 0.000000e+00 : f32
    %6 = vector.broadcast %cst_5 : f32 to vector<8x64xf32>
    %7 = arith.maximumf %5, %6 : vector<8x64xf32>
    %c0_6 = arith.constant 0 : index
    %c0_7 = arith.constant 0 : index
    %8 = vector.load %arg4[%c0_6, %c0_7] : memref<64x32xf32, #tpu.memory_space<vmem>>, vector<64x32xf32>
    %cst_8 = arith.constant dense<0.000000e+00> : vector<8x32xf32>
    %9 = tpu.matmul %7, %8, %cst_8 {dimension_numbers = #tpu.dot_dimension_numbers<[1], [0], [0], [1], [0, 0, 1, 1], [], []>, precision = #tpu.contract_precision<fp32>} : vector<8x64xf32>, vector<64x32xf32>, vector<8x32xf32> -> vector<8x32xf32>
    %c0_9 = arith.constant 0 : index
    %c0_10 = arith.constant 0 : index
    %10 = vector.load %arg5[%c0_9, %c0_10] : memref<1x32xf32, #tpu.memory_space<vmem>>, vector<1x32xf32>
    %11 = vector.broadcast %10 : vector<1x32xf32> to vector<8x32xf32>
    %12 = arith.addf %9, %11 : vector<8x32xf32>
    %c0_11 = arith.constant 0 : index
    %c0_12 = arith.constant 0 : index
    %13 = vector.load %arg6[%c0_11, %c0_12] : memref<1x64xf32, #tpu.memory_space<vmem>>, vector<1x64xf32>
    %14 = vector.broadcast %13 : vector<1x64xf32> to vector<8x64xf32>
    %15 = arith.mulf %7, %14 : vector<8x64xf32>
    %cst_13 = arith.constant dense<0.000000e+00> : vector<8xf32>
    %16 = vector.multi_reduction <add>, %15, %cst_13 [1] : vector<8x64xf32> to vector<8xf32>
    %17 = vector.shape_cast %16 : vector<8xf32> to vector<8x1xf32>
    %c0_14 = arith.constant 0 : index
    %c0_15 = arith.constant 0 : index
    %18 = memref.load %arg7[%c0_14, %c0_15] : memref<1x1xf32, #tpu.memory_space<smem>>
    %19 = vector.broadcast %18 : f32 to vector<8x1xf32>
    %20 = arith.addf %17, %19 : vector<8x1xf32>
    %cst_16 = arith.constant 0.000000e+00 : f32
    %21 = vector.broadcast %cst_16 : f32 to vector<8x1xf32>
    %22 = arith.subf %21, %20 : vector<8x1xf32>
    %23 = math.exp %22 : vector<8x1xf32>
    %cst_17 = arith.constant 1.000000e+00 : f32
    %24 = vector.broadcast %cst_17 : f32 to vector<8x1xf32>
    %25 = arith.addf %24, %23 : vector<8x1xf32>
    %cst_18 = arith.constant 1.000000e+00 : f32
    %26 = vector.broadcast %cst_18 : f32 to vector<8x1xf32>
    %27 = arith.divf %26, %25 : vector<8x1xf32>
    %28 = vector.broadcast %27 : vector<8x1xf32> to vector<8x32xf32>
    %29 = arith.mulf %28, %12 : vector<8x32xf32>
    %c0_19 = arith.constant 0 : index
    %c0_20 = arith.constant 0 : index
    %30 = vector.load %arg8[%c0_19, %c0_20] : memref<8x32xf32, #tpu.memory_space<vmem>>, vector<8x32xf32>
    tpu.vector_store %arg8[%c0_19, %c0_20], %29 {strides = array<i32>} : memref<8x32xf32, #tpu.memory_space<vmem>>, vector<8x32xf32>,
    return
  }
  func.func @transform_0(%arg0: i32) -> (i32, i32) {
    %c0_i32 = arith.constant 0 : i32
    %c0_i32_0 = arith.constant 0 : i32
    return %arg0, %c0_i32 : i32, i32
  }
  func.func @transform_1(%arg0: i32) -> (i32, i32) {
    %c0_i32 = arith.constant 0 : i32
    %c0_i32_0 = arith.constant 0 : i32
    %c0_i32_1 = arith.constant 0 : i32
    return %c0_i32, %c0_i32_0 : i32, i32
  }
  func.func @transform_2(%arg0: i32) -> (i32, i32) {
    %c0_i32 = arith.constant 0 : i32
    %c0_i32_0 = arith.constant 0 : i32
    %c0_i32_1 = arith.constant 0 : i32
    return %c0_i32, %c0_i32_0 : i32, i32
  }
  func.func @transform_3(%arg0: i32) -> (i32, i32) {
    %c0_i32 = arith.constant 0 : i32
    %c0_i32_0 = arith.constant 0 : i32
    %c0_i32_1 = arith.constant 0 : i32
    return %c0_i32, %c0_i32_0 : i32, i32
  }
  func.func @transform_4(%arg0: i32) -> (i32, i32) {
    %c0_i32 = arith.constant 0 : i32
    %c0_i32_0 = arith.constant 0 : i32
    %c0_i32_1 = arith.constant 0 : i32
    return %c0_i32, %c0_i32_0 : i32, i32
  }
  func.func @transform_5(%arg0: i32) -> (i32, i32) {
    %c0_i32 = arith.constant 0 : i32
    %c0_i32_0 = arith.constant 0 : i32
    %c0_i32_1 = arith.constant 0 : i32
    return %c0_i32, %c0_i32_0 : i32, i32
  }
  func.func @transform_6(%arg0: i32) -> (i32, i32) {
    %c0_i32 = arith.constant 0 : i32
    %c0_i32_0 = arith.constant 0 : i32
    %c0_i32_1 = arith.constant 0 : i32
    return %c0_i32, %c0_i32_0 : i32, i32
  }
  func.func @transform_7(%arg0: i32) -> (i32, i32) {
    %c0_i32 = arith.constant 0 : i32
    %c0_i32_0 = arith.constant 0 : i32
    return %arg0, %c0_i32 : i32, i32
  }
}

module attributes {stable_mosaic.version = 11 : i64} {
  func.func @_raptors_perceptron_kernel(%arg0: i32, %arg1: memref<8x32xf32, #tpu.memory_space<vmem>>, %arg2: memref<32x64xf32, #tpu.memory_space<vmem>>, %arg3: memref<1x64xf32, #tpu.memory_space<vmem>>, %arg4: memref<64x32xf32, #tpu.memory_space<vmem>>, %arg5: memref<1x32xf32, #tpu.memory_space<vmem>>, %arg6: memref<1x64xf32, #tpu.memory_space<vmem>>, %arg7: memref<1x1xf32, #tpu.memory_space<smem>>, %arg8: memref<8x32xf32, #tpu.memory_space<vmem>>) attributes {dimension_semantics = [#tpu.dimension_semantics<parallel>], iteration_bounds = array<i64: 2>, scalar_prefetch = 0 : i64, scratch_operands = 0 : i64, tpu.core_type = #tpu.core_type<tc>, window_params = [{transform_indices = @transform_0, window_bounds = array<i64: 8, 32>}, {pipeline_mode = #tpu.pipeline_mode<synchronous>, transform_indices = @transform_1, window_bounds = array<i64: 32, 64>}, {pipeline_mode = #tpu.pipeline_mode<synchronous>, transform_indices = @transform_2, window_bounds = array<i64: 1, 64>}, {pipeline_mode = #tpu.pipeline_mode<synchronous>, transform_indices = @transform_3, window_bounds = array<i64: 64, 32>}, {pipeline_mode = #tpu.pipeline_mode<synchronous>, transform_indices = @transform_4, window_bounds = array<i64: 1, 32>}, {pipeline_mode = #tpu.pipeline_mode<synchronous>, transform_indices = @transform_5, window_bounds = array<i64: 1, 64>}, {transform_indices = @transform_6, window_bounds = array<i64: 1, 1>}, {transform_indices = @transform_7, window_bounds = array<i64: 8, 32>}]} {
    %c0 = arith.constant 0 : index
    %c0_0 = arith.constant 0 : index
    %0 = vector.load %arg1[%c0, %c0_0] : memref<8x32xf32, #tpu.memory_space<vmem>>, vector<8x32xf32>
    %c0_1 = arith.constant 0 : index
    %c0_2 = arith.constant 0 : index
    %1 = vector.load %arg2[%c0_1, %c0_2] : memref<32x64xf32, #tpu.memory_space<vmem>>, vector<32x64xf32>
    %cst = arith.constant dense<0.000000e+00> : vector<8x64xf32>
    %2 = tpu.matmul %0, %1, %cst {dimension_numbers = #tpu.dot_dimension_numbers<[1], [0], [0], [1], [0, 0, 1, 1], [], []>, precision = #tpu.contract_precision<fp32>} : vector<8x32xf32>, vector<32x64xf32>, vector<8x64xf32> -> vector<8x64xf32>
    %c0_3 = arith.constant 0 : index
    %c0_4 = arith.constant 0 : index
    %3 = vector.load %arg3[%c0_3, %c0_4] : memref<1x64xf32, #tpu.memory_space<vmem>>, vector<1x64xf32>
    %4 = vector.broadcast %3 : vector<1x64xf32> to vector<8x64xf32>
    %5 = arith.addf %2, %4 : vector<8x64xf32>
    %cst_5 = arith.constant 0.000000e+00 : f32
    %6 = vector.broadcast %cst_5 : f32 to vector<8x64xf32>
    %7 = arith.maximumf %5, %6 : vector<8x64xf32>
    %c0_6 = arith.constant 0 : index
    %c0_7 = arith.constant 0 : index
    %8 = vector.load %arg4[%c0_6, %c0_7] : memref<64x32xf32, #tpu.memory_space<vmem>>, vector<64x32xf32>
    %cst_8 = arith.constant dense<0.000000e+00> : vector<8x32xf32>
    %9 = tpu.matmul %7, %8, %cst_8 {dimension_numbers = #tpu.dot_dimension_numbers<[1], [0], [0], [1], [0, 0, 1, 1], [], []>, precision = #tpu.contract_precision<fp32>} : vector<8x64xf32>, vector<64x32xf32>, vector<8x32xf32> -> vector<8x32xf32>
    %c0_9 = arith.constant 0 : index
    %c0_10 = arith.constant 0 : index
    %10 = vector.load %arg5[%c0_9, %c0_10] : memref<1x32xf32, #tpu.memory_space<vmem>>, vector<1x32xf32>
    %11 = vector.broadcast %10 : vector<1x32xf32> to vector<8x32xf32>
    %12 = arith.addf %9, %11 : vector<8x32xf32>
    %c0_11 = arith.constant 0 : index
    %c0_12 = arith.constant 0 : index
    %13 = vector.load %arg6[%c0_11, %c0_12] : memref<1x64xf32, #tpu.memory_space<vmem>>, vector<1x64xf32>
    %14 = vector.broadcast %13 : vector<1x64xf32> to vector<8x64xf32>
    %15 = arith.mulf %7, %14 : vector<8x64xf32>
    %cst_13 = arith.constant dense<0.000000e+00> : vector<8xf32>
    %16 = vector.multi_reduction <add>, %15, %cst_13 [1] : vector<8x64xf32> to vector<8xf32>
    %17 = vector.shape_cast %16 : vector<8xf32> to vector<8x1xf32>
    %c0_14 = arith.constant 0 : index
    %c0_15 = arith.constant 0 : index
    %18 = memref.load %arg7[%c0_14, %c0_15] : memref<1x1xf32, #tpu.memory_space<smem>>
    %19 = vector.broadcast %18 : f32 to vector<8x1xf32>
    %20 = arith.addf %17, %19 : vector<8x1xf32>
    %cst_16 = arith.constant 0.000000e+00 : f32
    %21 = vector.broadcast %cst_16 : f32 to vector<8x1xf32>
    %22 = arith.subf %21, %20 : vector<8x1xf32>
    %23 = math.exp %22 : vector<8x1xf32>
    %cst_17 = arith.constant 1.000000e+00 : f32
    %24 = vector.broadcast %cst_17 : f32 to vector<8x1xf32>
    %25 = arith.addf %24, %23 : vector<8x1xf32>
    %cst_18 = arith.constant 1.000000e+00 : f32
    %26 = vector.broadcast %cst_18 : f32 to vector<8x1xf32>
    %27 = arith.divf %26, %25 : vector<8x1xf32>
    %28 = vector.broadcast %27 : vector<8x1xf32> to vector<8x32xf32>
    %29 = arith.mulf %28, %12 : vector<8x32xf32>
    %c0_19 = arith.constant 0 : index
    %c0_20 = arith.constant 0 : index
    %30 = vector.load %arg8[%c0_19, %c0_20] : memref<8x32xf32, #tpu.memory_space<vmem>>, vector<8x32xf32>
    tpu.vector_store %arg8[%c0_19, %c0_20], %29 {strides = array<i32>} : memref<8x32xf32, #tpu.memory_space<vmem>>, vector<8x32xf32>,
    return
  }
  func.func @transform_0(%arg0: i32) -> (i32, i32) {
    %c0_i32 = arith.constant 0 : i32
    %c0_i32_0 = arith.constant 0 : i32
    return %arg0, %c0_i32 : i32, i32
  }
  func.func @transform_1(%arg0: i32) -> (i32, i32) {
    %c0_i32 = arith.constant 0 : i32
    %c0_i32_0 = arith.constant 0 : i32
    %c0_i32_1 = arith.constant 0 : i32
    return %c0_i32, %c0_i32_0 : i32, i32
  }
  func.func @transform_2(%arg0: i32) -> (i32, i32) {
    %c0_i32 = arith.constant 0 : i32
    %c0_i32_0 = arith.constant 0 : i32
    %c0_i32_1 = arith.constant 0 : i32
    return %c0_i32, %c0_i32_0 : i32, i32
  }
  func.func @transform_3(%arg0: i32) -> (i32, i32) {
    %c0_i32 = arith.constant 0 : i32
    %c0_i32_0 = arith.constant 0 : i32
    %c0_i32_1 = arith.constant 0 : i32
    return %c0_i32, %c0_i32_0 : i32, i32
  }
  func.func @transform_4(%arg0: i32) -> (i32, i32) {
    %c0_i32 = arith.constant 0 : i32
    %c0_i32_0 = arith.constant 0 : i32
    %c0_i32_1 = arith.constant 0 : i32
    return %c0_i32, %c0_i32_0 : i32, i32
  }
  func.func @transform_5(%arg0: i32) -> (i32, i32) {
    %c0_i32 = arith.constant 0 : i32
    %c0_i32_0 = arith.constant 0 : i32
    %c0_i32_1 = arith.constant 0 : i32
    return %c0_i32, %c0_i32_0 : i32, i32
  }
  func.func @transform_6(%arg0: i32) -> (i32, i32) {
    %c0_i32 = arith.constant 0 : i32
    %c0_i32_0 = arith.constant 0 : i32
    %c0_i32_1 = arith.constant 0 : i32
    return %c0_i32, %c0_i32_0 : i32, i32
  }
  func.func @transform_7(%arg0: i32) -> (i32, i32) {
    %c0_i32 = arith.constant 0 : i32
    %c0_i32_0 = arith.constant 0 : i32
    return %arg0, %c0_i32 : i32, i32
  }
}

</mosaic_0001>

<llo_original>
// kernel: tpu_custom_call.1
$region0: #{tpu_custom_call.1}
  #allocation0 [shape = 'u32[]', space=smem, size = 0x4, offset = 0x4, fixed_abs, tag = 'smem constant byte address 0x4 - core index']
  #allocation1 [shape = 'u32[144,128]{1,0:T(1,128)}', space=vmem, size = 0x12000, scoped, tag = 'internal scratch']
  #allocation2 [shape = 'f32[1,1]{1,0:T(1,128)S(6)}', space=smem, size = 0x200, scoped, tag = 'scoped memory for tpu_custom_call.1']
  %s0 = inlined_call_operand.vmem [shape: f32[16,32], index: 0, kind: input, shape index: {}]
  %s1 = inlined_call_operand.vmem [shape: f32[32,64], index: 1, kind: input, shape index: {}]
  %s2 = inlined_call_operand.vmem [shape: f32[1,64], index: 2, kind: input, shape index: {}]
  %s3 = inlined_call_operand.vmem [shape: f32[64,32], index: 3, kind: input, shape index: {}]
  %s4 = inlined_call_operand.vmem [shape: f32[1,32], index: 4, kind: input, shape index: {}]
  %s5 = inlined_call_operand.vmem [shape: f32[1,64], index: 5, kind: input, shape index: {}]
  %s6 = inlined_call_operand.<no memory space> [shape: f32[1,1], index: 6, kind: input, shape index: {}]
  %s7 = inlined_call_operand.hbm [shape: f32[16,32], index: 7, kind: output, shape index: {}]
  %s8 = sld [smem:[#allocation0]]
  $region61: #{tpu_custom_call.1} parent=0
    _
  %s10 = ssub.s32 1, %s8
  %s11 = scalar_select 0, %s10, %s8
  %12 = sst [smem:[#allocation2]] %s6
  $region1: #{tpu_custom_call.1} parent=0
    #allocation3 [shape = 'u8[8192]{0}', space=vmem, size = 0x2000, scoped, tag = 'output window, operand 0']
    #allocation4 [shape = 's32[2]{0}', space=sflag, size = 0x8, scoped, tag = 'scoped memory for tpu_custom_call.1']
    %13 = vsyncpa [#allocation4], 0
    %s14 = scalar_lea.sflag [#allocation4], 1
    %15 = vsyncpa %s14, 0
    loop: start=0, step=1, limit=4
    $region2: #{tpu_custom_call.1} parent=1 // loop_pre_header
      _
    $region3: #{tpu_custom_call.1} parent=1 // loop_header
      %s17 = sphi 0, %s21
      %p18 = scmp.ge.s32.totalorder %s17, 4
      %s27 = sphi 0, %s29
      %s30 = sphi 0, %s27
      %s31 = sphi 0, %s30
      %s47 = sphi 0, %s31
      %s51 = sphi 0, %s51
      %s53 = sphi 0, %s51
      %s54 = sphi 0, %s53
      %s68 = sphi 0, %s54
      %s72 = sphi 0, %s72
      %s74 = sphi 0, %s72
      %s75 = sphi 0, %s74
      %s89 = sphi 0, %s75
      %s93 = sphi 0, %s93
      %s95 = sphi 0, %s93
      %s96 = sphi 0, %s95
      %s110 = sphi 0, %s96
      %s114 = sphi 0, %s114
      %s116 = sphi 0, %s114
      %s117 = sphi 0, %s116
      %s131 = sphi 0, %s117
      %s135 = sphi 0, %s135
      %s137 = sphi 0, %s135
      %s138 = sphi 0, %s137
      %s152 = sphi 0, %s138
      %s156 = sphi 0, %s156
      %s158 = sphi 0, %s156
      %s159 = sphi 0, %s158
      %s173 = sphi 0, %s159
      %s179 = sphi 0, %s181
      %s182 = sphi 0, %s179
      %s183 = sphi 0, %s182
      %s199 = sphi 0, %s183
    $region4: #{tpu_custom_call.1} parent=1 // loop_header_branch
      %20 = sbr.rel (%p18) target = $region8
    $region5: #{tpu_custom_call.1} parent=1 // loop_body
      %s22 = ssub.s32 %s17, 1
      %s23 = ssub.s32 %s17, 2
      %s24 = sadd.s32 %s17, 1
      %s25 = ssub.s32 %s17, %s24
      %p26 = scmp.eq.s32.totalorder %s25, 0
      %s28 = sadd.s32 %s27, 1
      %s29 = scalar_select %p26, %s27, %s28
      %p32 = pneg %p26
      %p33 = scmp.eq.s32.totalorder %s17, 1
      %p34 = por %p32, %p33
      %p35 = scmp.ne.s32.totalorder %s27, %s30
      %p36 = scmp.eq.s32.totalorder %s17, 0
      %p37 = por %p35, %p36
      %p38 = scmp.ne.s32.totalorder %s27, %s30
      %p39 = scmp.eq.s32.totalorder %s22, 1
      %p40 = por %p38, %p39
      %p41 = scmp.ne.s32.totalorder %s30, %s31
      %p42 = scmp.eq.s32.totalorder %s22, 0
      %p43 = por %p41, %p42
      %p44 = scmp.ne.s32.totalorder %s30, %s31
      %p45 = scmp.eq.s32.totalorder %s23, 1
      %p46 = por %p44, %p45
      %p48 = scmp.ne.s32.totalorder %s31, %s47
      %p49 = scmp.eq.s32.totalorder %s23, 0
      %p50 = por %p48, %p49
      %s52 = sadd.s32 %s51, 1
      %p55 = scmp.eq.s32.totalorder %s17, 1
      %p56 = scmp.ne.s32.totalorder %s51, %s53
      %p57 = scmp.eq.s32.totalorder %s17, 0
      %p58 = por %p56, %p57
      %p59 = scmp.ne.s32.totalorder %s51, %s53
      %p60 = scmp.eq.s32.totalorder %s22, 1
      %p61 = por %p59, %p60
      %p62 = scmp.ne.s32.totalorder %s53, %s54
      %p63 = scmp.eq.s32.totalorder %s22, 0
      %p64 = por %p62, %p63
      %p65 = scmp.ne.s32.totalorder %s53, %s54
      %p66 = scmp.eq.s32.totalorder %s23, 1
      %p67 = por %p65, %p66
      %p69 = scmp.ne.s32.totalorder %s54, %s68
      %p70 = scmp.eq.s32.totalorder %s23, 0
      %p71 = por %p69, %p70
      %s73 = sadd.s32 %s72, 1
      %p76 = scmp.eq.s32.totalorder %s17, 1
      %p77 = scmp.ne.s32.totalorder %s72, %s74
      %p78 = scmp.eq.s32.totalorder %s17, 0
      %p79 = por %p77, %p78
      %p80 = scmp.ne.s32.totalorder %s72, %s74
      %p81 = scmp.eq.s32.totalorder %s22, 1
      %p82 = por %p80, %p81
      %p83 = scmp.ne.s32.totalorder %s74, %s75
      %p84 = scmp.eq.s32.totalorder %s22, 0
      %p85 = por %p83, %p84
      %p86 = scmp.ne.s32.totalorder %s74, %s75
      %p87 = scmp.eq.s32.totalorder %s23, 1
      %p88 = por %p86, %p87
      %p90 = scmp.ne.s32.totalorder %s75, %s89
      %p91 = scmp.eq.s32.totalorder %s23, 0
      %p92 = por %p90, %p91
      %s94 = sadd.s32 %s93, 1
      %p97 = scmp.eq.s32.totalorder %s17, 1
      %p98 = scmp.ne.s32.totalorder %s93, %s95
      %p99 = scmp.eq.s32.totalorder %s17, 0
      %p100 = por %p98, %p99
      %p101 = scmp.ne.s32.totalorder %s93, %s95
      %p102 = scmp.eq.s32.totalorder %s22, 1
      %p103 = por %p101, %p102
      %p104 = scmp.ne.s32.totalorder %s95, %s96
      %p105 = scmp.eq.s32.totalorder %s22, 0
      %p106 = por %p104, %p105
      %p107 = scmp.ne.s32.totalorder %s95, %s96
      %p108 = scmp.eq.s32.totalorder %s23, 1
      %p109 = por %p107, %p108
      %p111 = scmp.ne.s32.totalorder %s96, %s110
      %p112 = scmp.eq.s32.totalorder %s23, 0
      %p113 = por %p111, %p112
      %s115 = sadd.s32 %s114, 1
      %p118 = scmp.eq.s32.totalorder %s17, 1
      %p119 = scmp.ne.s32.totalorder %s114, %s116
      %p120 = scmp.eq.s32.totalorder %s17, 0
      %p121 = por %p119, %p120
      %p122 = scmp.ne.s32.totalorder %s114, %s116
      %p123 = scmp.eq.s32.totalorder %s22, 1
      %p124 = por %p122, %p123
      %p125 = scmp.ne.s32.totalorder %s116, %s117
      %p126 = scmp.eq.s32.totalorder %s22, 0
      %p127 = por %p125, %p126
      %p128 = scmp.ne.s32.totalorder %s116, %s117
      %p129 = scmp.eq.s32.totalorder %s23, 1
      %p130 = por %p128, %p129
      %p132 = scmp.ne.s32.totalorder %s117, %s131
      %p133 = scmp.eq.s32.totalorder %s23, 0
      %p134 = por %p132, %p133
      %s136 = sadd.s32 %s135, 1
      %p139 = scmp.eq.s32.totalorder %s17, 1
      %p140 = scmp.ne.s32.totalorder %s135, %s137
      %p141 = scmp.eq.s32.totalorder %s17, 0
      %p142 = por %p140, %p141
      %p143 = scmp.ne.s32.totalorder %s135, %s137
      %p144 = scmp.eq.s32.totalorder %s22, 1
      %p145 = por %p143, %p144
      %p146 = scmp.ne.s32.totalorder %s137, %s138
      %p147 = scmp.eq.s32.totalorder %s22, 0
      %p148 = por %p146, %p147
      %p149 = scmp.ne.s32.totalorder %s137, %s138
      %p150 = scmp.eq.s32.totalorder %s23, 1
      %p151 = por %p149, %p150
      %p153 = scmp.ne.s32.totalorder %s138, %s152
      %p154 = scmp.eq.s32.totalorder %s23, 0
      %p155 = por %p153, %p154
      %s157 = sadd.s32 %s156, 1
      %p160 = scmp.eq.s32.totalorder %s17, 1
      %p161 = scmp.ne.s32.totalorder %s156, %s158
      %p162 = scmp.eq.s32.totalorder %s17, 0
      %p163 = por %p161, %p162
      %p164 = scmp.ne.s32.totalorder %s156, %s158
      %p165 = scmp.eq.s32.totalorder %s22, 1
      %p166 = por %p164, %p165
      %p167 = scmp.ne.s32.totalorder %s158, %s159
      %p168 = scmp.eq.s32.totalorder %s22, 0
      %p169 = por %p167, %p168
      %p170 = scmp.ne.s32.totalorder %s158, %s159
      %p171 = scmp.eq.s32.totalorder %s23, 1
      %p172 = por %p170, %p171
      %p174 = scmp.ne.s32.totalorder %s159, %s173
      %p175 = scmp.eq.s32.totalorder %s23, 0
      %p176 = por %p174, %p175
      %s177 = ssub.s32 %s17, %s24
      %p178 = scmp.eq.s32.totalorder %s177, 0
      %s180 = sadd.s32 %s179, 1
      %s181 = scalar_select %p178, %s179, %s180
      %p184 = pneg %p178
      %p185 = scmp.eq.s32.totalorder %s17, 1
      %p186 = por %p184, %p185
      %p187 = scmp.ne.s32.totalorder %s179, %s182
      %p188 = scmp.eq.s32.totalorder %s17, 0
      %p189 = por %p187, %p188
      %p190 = scmp.ne.s32.totalorder %s179, %s182
      %p191 = scmp.eq.s32.totalorder %s22, 1
      %p192 = por %p190, %p191
      %p193 = scmp.ne.s32.totalorder %s182, %s183
      %p194 = scmp.eq.s32.totalorder %s22, 0
      %p195 = por %p193, %p194
      %p196 = scmp.ne.s32.totalorder %s182, %s183
      %p197 = scmp.eq.s32.totalorder %s23, 1
      %p198 = por %p196, %p197
      %p200 = scmp.ne.s32.totalorder %s183, %s199
      %p201 = scmp.eq.s32.totalorder %s23, 0
      %p202 = por %p200, %p201
      %p203 = scmp.le.s32.totalorder 1, %s17
      %p204 = scmp.lt.s32.totalorder %s17, 3
      %p205 = pnand %p203, %p204
      %p206 = pneg %p205
      // Predicated region
      $region9: #{tpu_custom_call.1} parent=5 // pred_check
        _
      $region10: #{tpu_custom_call.1} parent=5 // pred_check_branch
        %208 = sbr.rel (%p205) target = $region12
      $region11: #{tpu_custom_call.1} parent=5 // pred_region
        %s209 = ssub.s32 %s17, 1
        // Predicated region
        $region13: #{tpu_custom_call.1} parent=11 // pred_check
          %p210 = pneg %p64
        $region14: #{tpu_custom_call.1} parent=11 // pred_check_branch
          %212 = sbr.rel (%p210) target = $region16
        $region15: #{tpu_custom_call.1} parent=11 // pred_region
          _
        $region16: #{tpu_custom_call.1} parent=11 // pred_fallthru
          _
        // Predicated region
        $region17: #{tpu_custom_call.1} parent=11 // pred_check
          %p213 = pneg %p85
        $region18: #{tpu_custom_call.1} parent=11 // pred_check_branch
          %215 = sbr.rel (%p213) target = $region20
        $region19: #{tpu_custom_call.1} parent=11 // pred_region
          _
        $region20: #{tpu_custom_call.1} parent=11 // pred_fallthru
          _
        // Predicated region
        $region21: #{tpu_custom_call.1} parent=11 // pred_check
          %p216 = pneg %p106
        $region22: #{tpu_custom_call.1} parent=11 // pred_check_branch
          %218 = sbr.rel (%p216) target = $region24
        $region23: #{tpu_custom_call.1} parent=11 // pred_region
          _
        $region24: #{tpu_custom_call.1} parent=11 // pred_fallthru
          _
        // Predicated region
        $region25: #{tpu_custom_call.1} parent=11 // pred_check
          %p219 = pneg %p127
        $region26: #{tpu_custom_call.1} parent=11 // pred_check_branch
          %221 = sbr.rel (%p219) target = $region28
        $region27: #{tpu_custom_call.1} parent=11 // pred_region
          _
        $region28: #{tpu_custom_call.1} parent=11 // pred_fallthru
          _
        // Predicated region
        $region29: #{tpu_custom_call.1} parent=11 // pred_check
          %p222 = pneg %p148
        $region30: #{tpu_custom_call.1} parent=11 // pred_check_branch
          %224 = sbr.rel (%p222) target = $region32
        $region31: #{tpu_custom_call.1} parent=11 // pred_region
          _
        $region32: #{tpu_custom_call.1} parent=11 // pred_fallthru
          _
        // Predicated region
        $region33: #{tpu_custom_call.1} parent=11 // pred_check
          %p225 = pneg %p169
        $region34: #{tpu_custom_call.1} parent=11 // pred_check_branch
          %227 = sbr.rel (%p225) target = $region36
        $region35: #{tpu_custom_call.1} parent=11 // pred_region
          _
        $region36: #{tpu_custom_call.1} parent=11 // pred_fallthru
          _
      $region12: #{tpu_custom_call.1} parent=5 // pred_fallthru
        _
      %p228 = scmp.lt.s32.totalorder %s17, 2
      // Predicated region
      $region37: #{tpu_custom_call.1} parent=5 // pred_check
        %p229 = pneg %p228
      $region38: #{tpu_custom_call.1} parent=5 // pred_check_branch
        %231 = sbr.rel (%p229) target = $region40
      $region39: #{tpu_custom_call.1} parent=5 // pred_region
        // Predicated region
        $region41: #{tpu_custom_call.1} parent=39 // pred_check
          %p232 = pneg %p37
        $region42: #{tpu_custom_call.1} parent=39 // pred_check_branch
          %234 = sbr.rel (%p232) target = $region44
        $region43: #{tpu_custom_call.1} parent=39 // pred_region
          %p235 = scmp.lt.s32.totalorder %s17, 1
          %s236 = scalar_select %p235, %s17, 1
          %s237 = smul.addr %s236, 8
          %s238 = scalar_lea.vmem %s0, %s237
        $region44: #{tpu_custom_call.1} parent=39 // pred_fallthru
          _
      $region40: #{tpu_custom_call.1} parent=5 // pred_fallthru
        _
      %p239 = scmp.le.s32.totalorder 1, %s17
      %p240 = scmp.lt.s32.totalorder %s17, 3
      %p241 = pnand %p239, %p240
      %p242 = pneg %p241
      // Predicated region
      $region45: #{tpu_custom_call.1} parent=5 // pred_check
        _
      $region46: #{tpu_custom_call.1} parent=5 // pred_check_branch
        %244 = sbr.rel (%p241) target = $region48
      $region47: #{tpu_custom_call.1} parent=5 // pred_region
        %s245 = ssub.s32 %s17, 1
        %p246 = scmp.lt.s32.totalorder %s22, 1
        %s247 = scalar_select %p246, %s22, 1
        %s248 = smul.addr %s247, 8
        %s249 = scalar_lea.vmem %s0, %s248
        %p250 = pneg %p43
        %p251 = pneg %p40
        %p252 = pneg %p64
        %p253 = pneg %p61
        %p254 = pneg %p85
        %p255 = pneg %p82
        %p256 = pneg %p106
        %p257 = pneg %p103
        %p258 = pneg %p127
        %p259 = pneg %p124
        %p260 = pneg %p148
        %p261 = pneg %p145
        %p262 = pneg %p169
        %p263 = pneg %p166
        %p264 = pneg %p195
        %p265 = pneg %p192
        %s266 = sand.u32 %s182, 1
        %s267 = scalar_lea.sflag [#allocation4], %s266
        %s268 = sand.u32 %s182, 1
        %s269 = smul.addr %s268, 8
        %s270 = scalar_lea.vmem [#allocation3], %s269
        %p271 = scmp.lt.s32.totalorder %s22, 1
        %s272 = scalar_select %p271, %s22, 1
        %s273 = smul.addr %s272, 8
        %s274 = scalar_lea.vmem %s0, %s273
        %v275 = vld [vmem:[%s274] sm:$0xff]
        %v276 = vld [vmem:[%s1] sm:$0xff]
        %v277 = vld [vmem:[%s1 + $0x8] sm:$0xff]
        %v278 = vld [vmem:[%s1 + $0x10] sm:$0xff]
        %v279 = vld [vmem:[%s1 + $0x18] sm:$0xff]
        %v280 = vld [vmem:[%s2] sm:$0x1]
        %v282 = vlaneseq
        %v283 = vshrl.u32 %v282, 7
        %v284 = vsub.s32 0, %v283
        %v285 = vrot.slane %v280, %v284
        %vm287 = vcmask 261120
        %v289 = vsel %vm287, %v275, 0
        %291 = vmatprep.subr.mxu0 0.0
        %v292 = vand.u32 %v276, 4294901760
        %293 = vmatpush1.msra.mxu0 %v292
        %294 = vmatprep.subr.mxu0 0.0
        %v295 = vand.u32 %v277, 4294901760
        %296 = vmatpush1.msra.mxu0 %v295
        %297 = vmatprep.subr.mxu0 0.0
        %v298 = vand.u32 %v278, 4294901760
        %299 = vmatpush1.msra.mxu0 %v298
        %300 = vmatprep.subr.mxu0 0.0
        %v301 = vand.u32 %v279, 4294901760
        %302 = vmatpush1.msra.mxu0 %v301
        %303 = vmatprep.subr.mxu0 0.0
        %304 = vmatpush1.msra.mxu0 0.0
        %305 = vmatprep.subr.mxu0 0.0
        %306 = vmatpush1.msra.mxu0 0.0
        %307 = vmatprep.subr.mxu0 0.0
        %308 = vmatpush1.msra.mxu0 0.0
        %309 = vmatprep.subr.mxu0 0.0
        %310 = vmatpush1.msra.mxu0 0.0
        %311 = vmatprep.subr.mxu0 0.0
        %312 = vmatpush1.msra.mxu0 0.0
        %313 = vmatprep.subr.mxu0 0.0
        %314 = vmatpush1.msra.mxu0 0.0
        %315 = vmatprep.subr.mxu0 0.0
        %316 = vmatpush1.msra.mxu0 0.0
        %317 = vmatprep.subr.mxu0 0.0
        %318 = vmatpush1.msra.mxu0 0.0
        %319 = vmatprep.subr.mxu0 0.0
        %320 = vmatpush1.msra.mxu0 0.0
        %321 = vmatprep.subr.mxu0 0.0
        %322 = vmatpush1.msra.mxu0 0.0
        %323 = vmatprep.subr.mxu0 0.0
        %324 = vmatpush1.msra.mxu0 0.0
        %325 = vmatprep.subr.mxu0 0.0
        %326 = vmatpush1.msra.mxu0 0.0
        %327 = vmatprep.subr.mxu0 0.0
        %328 = vmatpush1.msra.mxu0 0.0
        %329 = vmatprep.subr.mxu0 0.0
        %330 = vmatpush1.msra.mxu0 0.0
        %331 = vmatprep.subr.mxu0 0.0
        %332 = vmatpush1.msra.mxu0 0.0
        %333 = vmatprep.subr.mxu0 0.0
        %334 = vmatpush1.msra.mxu0 0.0
        %335 = vmatprep.subr.mxu0 0.0
        %336 = vmatpush1.msra.mxu0 0.0
        %337 = vmatprep.subr.mxu0 0.0
        %338 = vmatpush1.msra.mxu0 0.0
        %339 = vmatprep.subr.mxu0 0.0
        %340 = vmatpush1.msra.mxu0 0.0
        %341 = vmatprep.subr.mxu0 0.0
        %342 = vmatpush1.msra.mxu0 0.0
        %343 = vmatprep.subr.mxu0 0.0
        %344 = vmatpush1.msra.mxu0 0.0
        %345 = vmatprep.subr.mxu0 0.0
        %346 = vmatpush1.msra.mxu0 0.0
        %347 = vmatprep.subr.mxu0 0.0
        %348 = vmatpush1.msra.mxu0 0.0
        %349 = vmatprep.subr.mxu0 0.0
        %350 = vmatpush1.msra.mxu0 0.0
        %351 = vmatprep.subr.mxu0 0.0
        %352 = vmatpush1.msra.mxu0 0.0
        %353 = vmatprep.subr.mxu0 0.0
        %354 = vmatpush1.msra.mxu0 0.0
        %355 = vmatprep.subr.mxu0 0.0
        %356 = vmatpush1.msra.mxu0 0.0
        %357 = vmatprep.subr.mxu0 0.0
        %358 = vmatpush1.msra.mxu0 0.0
        %359 = vmatprep.mubr.f32.mxu0 0.0
        %v360 = vand.u32 %v289, 4294901760
        %v361 = vsub.f32 %v289, %v360
        %v362 = vand.u32 %v361, 4294901760
        %v363 = vsub.f32 %v361, %v362
        %v364 = vand.u32 %v363, 4294901760
        %365 = vmatmul.mubr.f32.gmra.mrb[0].mxu0 %v364
        %v366 = vpop.f32.mrb[0].mxu0
        %v367 = vadd.f32 %v285, %v366
        %v368 = vpop.f32.mrb[0].mxu0
        %369 = vdwg.mxu0
        %370 = vmatprep.subr.mxu0 0.0
        %v371 = vand.u32 %v276, 4294901760
        %v372 = vsub.f32 %v276, %v371
        %v373 = vand.u32 %v372, 4294901760
        %v374 = vsub.f32 %v372, %v373
        %v375 = vand.u32 %v374, 4294901760
        %376 = vmatpush1.msra.mxu0 %v375
        %377 = vmatprep.subr.mxu0 0.0
        %v378 = vand.u32 %v277, 4294901760
        %v379 = vsub.f32 %v277, %v378
        %v380 = vand.u32 %v379, 4294901760
        %v381 = vsub.f32 %v379, %v380
        %v382 = vand.u32 %v381, 4294901760
        %383 = vmatpush1.msra.mxu0 %v382
        %384 = vmatprep.subr.mxu0 0.0
        %v385 = vand.u32 %v278, 4294901760
        %v386 = vsub.f32 %v278, %v385
        %v387 = vand.u32 %v386, 4294901760
        %v388 = vsub.f32 %v386, %v387
        %v389 = vand.u32 %v388, 4294901760
        %390 = vmatpush1.msra.mxu0 %v389
        %391 = vmatprep.subr.mxu0 0.0
        %v392 = vand.u32 %v279, 4294901760
        %v393 = vsub.f32 %v279, %v392
        %v394 = vand.u32 %v393, 4294901760
        %v395 = vsub.f32 %v393, %v394
        %v396 = vand.u32 %v395, 4294901760
        %397 = vmatpush1.msra.mxu0 %v396
        %398 = vmatprep.subr.mxu0 0.0
        %399 = vmatpush1.msra.mxu0 0.0
        %400 = vmatprep.subr.mxu0 0.0
        %401 = vmatpush1.msra.mxu0 0.0
        %402 = vmatprep.subr.mxu0 0.0
        %403 = vmatpush1.msra.mxu0 0.0
        %404 = vmatprep.subr.mxu0 0.0
        %405 = vmatpush1.msra.mxu0 0.0
        %406 = vmatprep.subr.mxu0 0.0
        %407 = vmatpush1.msra.mxu0 0.0
        %408 = vmatprep.subr.mxu0 0.0
        %409 = vmatpush1.msra.mxu0 0.0
        %410 = vmatprep.subr.mxu0 0.0
        %411 = vmatpush1.msra.mxu0 0.0
        %412 = vmatprep.subr.mxu0 0.0
        %413 = vmatpush1.msra.mxu0 0.0
        %414 = vmatprep.subr.mxu0 0.0
        %415 = vmatpush1.msra.mxu0 0.0
        %416 = vmatprep.subr.mxu0 0.0
        %417 = vmatpush1.msra.mxu0 0.0
        %418 = vmatprep.subr.mxu0 0.0
        %419 = vmatpush1.msra.mxu0 0.0
        %420 = vmatprep.subr.mxu0 0.0
        %421 = vmatpush1.msra.mxu0 0.0
        %422 = vmatprep.subr.mxu0 0.0
        %423 = vmatpush1.msra.mxu0 0.0
        %424 = vmatprep.subr.mxu0 0.0
        %425 = vmatpush1.msra.mxu0 0.0
        %426 = vmatprep.subr.mxu0 0.0
        %427 = vmatpush1.msra.mxu0 0.0
        %428 = vmatprep.subr.mxu0 0.0
        %429 = vmatpush1.msra.mxu0 0.0
        %430 = vmatprep.subr.mxu0 0.0
        %431 = vmatpush1.msra.mxu0 0.0
        %432 = vmatprep.subr.mxu0 0.0
        %433 = vmatpush1.msra.mxu0 0.0
        %434 = vmatprep.subr.mxu0 0.0
        %435 = vmatpush1.msra.mxu0 0.0
        %436 = vmatprep.subr.mxu0 0.0
        %437 = vmatpush1.msra.mxu0 0.0
        %438 = vmatprep.subr.mxu0 0.0
        %439 = vmatpush1.msra.mxu0 0.0
        %440 = vmatprep.subr.mxu0 0.0
        %441 = vmatpush1.msra.mxu0 0.0
        %442 = vmatprep.subr.mxu0 0.0
        %443 = vmatpush1.msra.mxu0 0.0
        %444 = vmatprep.subr.mxu0 0.0
        %445 = vmatpush1.msra.mxu0 0.0
        %446 = vmatprep.subr.mxu0 0.0
        %447 = vmatpush1.msra.mxu0 0.0
        %448 = vmatprep.subr.mxu0 0.0
        %449 = vmatpush1.msra.mxu0 0.0
        %450 = vmatprep.subr.mxu0 0.0
        %451 = vmatpush1.msra.mxu0 0.0
        %452 = vmatprep.subr.mxu0 0.0
        %453 = vmatpush1.msra.mxu0 0.0
        %454 = vmatprep.mubr.f32.mxu0 0.0
        %v455 = vand.u32 %v289, 4294901760
        %456 = vmatmul.mubr.f32.gmra.mrb[0].mxu0 %v455
        %v457 = vpop.f32.mrb[0].mxu0
        %v458 = vadd.f32 %v367, %v457
        %v459 = vpop.f32.mrb[0].mxu0
        %460 = vdwg.mxu0
        %461 = vmatprep.subr.mxu0 0.0
        %v462 = vand.u32 %v276, 4294901760
        %v463 = vsub.f32 %v276, %v462
        %464 = vmatpush1.msra.mxu0 %v463
        %465 = vmatprep.subr.mxu0 0.0
        %v466 = vand.u32 %v277, 4294901760
        %v467 = vsub.f32 %v277, %v466
        %468 = vmatpush1.msra.mxu0 %v467
        %469 = vmatprep.subr.mxu0 0.0
        %v470 = vand.u32 %v278, 4294901760
        %v471 = vsub.f32 %v278, %v470
        %472 = vmatpush1.msra.mxu0 %v471
        %473 = vmatprep.subr.mxu0 0.0
        %v474 = vand.u32 %v279, 4294901760
        %v475 = vsub.f32 %v279, %v474
        %476 = vmatpush1.msra.mxu0 %v475
        %477 = vmatprep.subr.mxu0 0.0
        %478 = vmatpush1.msra.mxu0 0.0
        %479 = vmatprep.subr.mxu0 0.0
        %480 = vmatpush1.msra.mxu0 0.0
        %481 = vmatprep.subr.mxu0 0.0
        %482 = vmatpush1.msra.mxu0 0.0
        %483 = vmatprep.subr.mxu0 0.0
        %484 = vmatpush1.msra.mxu0 0.0
        %485 = vmatprep.subr.mxu0 0.0
        %486 = vmatpush1.msra.mxu0 0.0
        %487 = vmatprep.subr.mxu0 0.0
        %488 = vmatpush1.msra.mxu0 0.0
        %489 = vmatprep.subr.mxu0 0.0
        %490 = vmatpush1.msra.mxu0 0.0
        %491 = vmatprep.subr.mxu0 0.0
        %492 = vmatpush1.msra.mxu0 0.0
        %493 = vmatprep.subr.mxu0 0.0
        %494 = vmatpush1.msra.mxu0 0.0
        %495 = vmatprep.subr.mxu0 0.0
        %496 = vmatpush1.msra.mxu0 0.0
        %497 = vmatprep.subr.mxu0 0.0
        %498 = vmatpush1.msra.mxu0 0.0
        %499 = vmatprep.subr.mxu0 0.0
        %500 = vmatpush1.msra.mxu0 0.0
        %501 = vmatprep.subr.mxu0 0.0
        %502 = vmatpush1.msra.mxu0 0.0
        %503 = vmatprep.subr.mxu0 0.0
        %504 = vmatpush1.msra.mxu0 0.0
        %505 = vmatprep.subr.mxu0 0.0
        %506 = vmatpush1.msra.mxu0 0.0
        %507 = vmatprep.subr.mxu0 0.0
        %508 = vmatpush1.msra.mxu0 0.0
        %509 = vmatprep.subr.mxu0 0.0
        %510 = vmatpush1.msra.mxu0 0.0
        %511 = vmatprep.subr.mxu0 0.0
        %512 = vmatpush1.msra.mxu0 0.0
        %513 = vmatprep.subr.mxu0 0.0
        %514 = vmatpush1.msra.mxu0 0.0
        %515 = vmatprep.subr.mxu0 0.0
        %516 = vmatpush1.msra.mxu0 0.0
        %517 = vmatprep.subr.mxu0 0.0
        %518 = vmatpush1.msra.mxu0 0.0
        %519 = vmatprep.subr.mxu0 0.0
        %520 = vmatpush1.msra.mxu0 0.0
        %521 = vmatprep.subr.mxu0 0.0
        %522 = vmatpush1.msra.mxu0 0.0
        %523 = vmatprep.subr.mxu0 0.0
        %524 = vmatpush1.msra.mxu0 0.0
        %525 = vmatprep.subr.mxu0 0.0
        %526 = vmatpush1.msra.mxu0 0.0
        %527 = vmatprep.subr.mxu0 0.0
        %528 = vmatpush1.msra.mxu0 0.0
        %529 = vmatprep.subr.mxu0 0.0
        %530 = vmatpush1.msra.mxu0 0.0
        %531 = vmatprep.subr.mxu0 0.0
        %532 = vmatpush1.msra.mxu0 0.0
        %533 = vmatprep.mubr.f32.mxu0 0.0
        %v534 = vand.u32 %v289, 4294901760
        %v535 = vsub.f32 %v289, %v534
        %536 = vmatmul.mubr.f32.gmra.mrb[0].mxu0 %v535
        %v537 = vpop.f32.mrb[0].mxu0
        %v538 = vadd.f32 %v458, %v537
        %v539 = vpop.f32.mrb[0].mxu0
        %540 = vdwg.mxu0
        %541 = vmatprep.subr.mxu0 0.0
        %v542 = vand.u32 %v276, 4294901760
        %543 = vmatpush1.msra.mxu0 %v542
        %544 = vmatprep.subr.mxu0 0.0
        %v545 = vand.u32 %v277, 4294901760
        %546 = vmatpush1.msra.mxu0 %v545
        %547 = vmatprep.subr.mxu0 0.0
        %v548 = vand.u32 %v278, 4294901760
        %549 = vmatpush1.msra.mxu0 %v548
        %550 = vmatprep.subr.mxu0 0.0
        %v551 = vand.u32 %v279, 4294901760
        %552 = vmatpush1.msra.mxu0 %v551
        %553 = vmatprep.subr.mxu0 0.0
        %554 = vmatpush1.msra.mxu0 0.0
        %555 = vmatprep.subr.mxu0 0.0
        %556 = vmatpush1.msra.mxu0 0.0
        %557 = vmatprep.subr.mxu0 0.0
        %558 = vmatpush1.msra.mxu0 0.0
        %559 = vmatprep.subr.mxu0 0.0
        %560 = vmatpush1.msra.mxu0 0.0
        %561 = vmatprep.subr.mxu0 0.0
        %562 = vmatpush1.msra.mxu0 0.0
        %563 = vmatprep.subr.mxu0 0.0
        %564 = vmatpush1.msra.mxu0 0.0
        %565 = vmatprep.subr.mxu0 0.0
        %566 = vmatpush1.msra.mxu0 0.0
        %567 = vmatprep.subr.mxu0 0.0
        %568 = vmatpush1.msra.mxu0 0.0
        %569 = vmatprep.subr.mxu0 0.0
        %570 = vmatpush1.msra.mxu0 0.0
        %571 = vmatprep.subr.mxu0 0.0
        %572 = vmatpush1.msra.mxu0 0.0
        %573 = vmatprep.subr.mxu0 0.0
        %574 = vmatpush1.msra.mxu0 0.0
        %575 = vmatprep.subr.mxu0 0.0
        %576 = vmatpush1.msra.mxu0 0.0
        %577 = vmatprep.subr.mxu0 0.0
        %578 = vmatpush1.msra.mxu0 0.0
        %579 = vmatprep.subr.mxu0 0.0
        %580 = vmatpush1.msra.mxu0 0.0
        %581 = vmatprep.subr.mxu0 0.0
        %582 = vmatpush1.msra.mxu0 0.0
        %583 = vmatprep.subr.mxu0 0.0
        %584 = vmatpush1.msra.mxu0 0.0
        %585 = vmatprep.subr.mxu0 0.0
        %586 = vmatpush1.msra.mxu0 0.0
        %587 = vmatprep.subr.mxu0 0.0
        %588 = vmatpush1.msra.mxu0 0.0
        %589 = vmatprep.subr.mxu0 0.0
        %590 = vmatpush1.msra.mxu0 0.0
        %591 = vmatprep.subr.mxu0 0.0
        %592 = vmatpush1.msra.mxu0 0.0
        %593 = vmatprep.subr.mxu0 0.0
        %594 = vmatpush1.msra.mxu0 0.0
        %595 = vmatprep.subr.mxu0 0.0
        %596 = vmatpush1.msra.mxu0 0.0
        %597 = vmatprep.subr.mxu0 0.0
        %598 = vmatpush1.msra.mxu0 0.0
        %599 = vmatprep.subr.mxu0 0.0
        %600 = vmatpush1.msra.mxu0 0.0
        %601 = vmatprep.subr.mxu0 0.0
        %602 = vmatpush1.msra.mxu0 0.0
        %603 = vmatprep.subr.mxu0 0.0
        %604 = vmatpush1.msra.mxu0 0.0
        %605 = vmatprep.subr.mxu0 0.0
        %606 = vmatpush1.msra.mxu0 0.0
        %607 = vmatprep.subr.mxu0 0.0
        %608 = vmatpush1.msra.mxu0 0.0
        %609 = vmatprep.mubr.f32.mxu0 0.0
        %v610 = vand.u32 %v289, 4294901760
        %v611 = vsub.f32 %v289, %v610
        %v612 = vand.u32 %v611, 4294901760
        %613 = vmatmul.mubr.f32.gmra.mrb[0].mxu0 %v612
        %v614 = vpop.f32.mrb[0].mxu0
        %v615 = vadd.f32 %v538, %v614
        %v616 = vpop.f32.mrb[0].mxu0
        %617 = vdwg.mxu0
        %618 = vmatprep.subr.mxu0 0.0
        %v619 = vand.u32 %v276, 4294901760
        %v620 = vsub.f32 %v276, %v619
        %v621 = vand.u32 %v620, 4294901760
        %622 = vmatpush1.msra.mxu0 %v621
        %623 = vmatprep.subr.mxu0 0.0
        %v624 = vand.u32 %v277, 4294901760
        %v625 = vsub.f32 %v277, %v624
        %v626 = vand.u32 %v625, 4294901760
        %627 = vmatpush1.msra.mxu0 %v626
        %628 = vmatprep.subr.mxu0 0.0
        %v629 = vand.u32 %v278, 4294901760
        %v630 = vsub.f32 %v278, %v629
        %v631 = vand.u32 %v630, 4294901760
        %632 = vmatpush1.msra.mxu0 %v631
        %633 = vmatprep.subr.mxu0 0.0
        %v634 = vand.u32 %v279, 4294901760
        %v635 = vsub.f32 %v279, %v634
        %v636 = vand.u32 %v635, 4294901760
        %637 = vmatpush1.msra.mxu0 %v636
        %638 = vmatprep.subr.mxu0 0.0
        %639 = vmatpush1.msra.mxu0 0.0
        %640 = vmatprep.subr.mxu0 0.0
        %641 = vmatpush1.msra.mxu0 0.0
        %642 = vmatprep.subr.mxu0 0.0
        %643 = vmatpush1.msra.mxu0 0.0
        %644 = vmatprep.subr.mxu0 0.0
        %645 = vmatpush1.msra.mxu0 0.0
        %646 = vmatprep.subr.mxu0 0.0
        %647 = vmatpush1.msra.mxu0 0.0
        %648 = vmatprep.subr.mxu0 0.0
        %649 = vmatpush1.msra.mxu0 0.0
        %650 = vmatprep.subr.mxu0 0.0
        %651 = vmatpush1.msra.mxu0 0.0
        %652 = vmatprep.subr.mxu0 0.0
        %653 = vmatpush1.msra.mxu0 0.0
        %654 = vmatprep.subr.mxu0 0.0
        %655 = vmatpush1.msra.mxu0 0.0
        %656 = vmatprep.subr.mxu0 0.0
        %657 = vmatpush1.msra.mxu0 0.0
        %658 = vmatprep.subr.mxu0 0.0
        %659 = vmatpush1.msra.mxu0 0.0
        %660 = vmatprep.subr.mxu0 0.0
        %661 = vmatpush1.msra.mxu0 0.0
        %662 = vmatprep.subr.mxu0 0.0
        %663 = vmatpush1.msra.mxu0 0.0
        %664 = vmatprep.subr.mxu0 0.0
        %665 = vmatpush1.msra.mxu0 0.0
        %666 = vmatprep.subr.mxu0 0.0
        %667 = vmatpush1.msra.mxu0 0.0
        %668 = vmatprep.subr.mxu0 0.0
        %669 = vmatpush1.msra.mxu0 0.0
        %670 = vmatprep.subr.mxu0 0.0
        %671 = vmatpush1.msra.mxu0 0.0
        %672 = vmatprep.subr.mxu0 0.0
        %673 = vmatpush1.msra.mxu0 0.0
        %674 = vmatprep.subr.mxu0 0.0
        %675 = vmatpush1.msra.mxu0 0.0
        %676 = vmatprep.subr.mxu0 0.0
        %677 = vmatpush1.msra.mxu0 0.0
        %678 = vmatprep.subr.mxu0 0.0
        %679 = vmatpush1.msra.mxu0 0.0
        %680 = vmatprep.subr.mxu0 0.0
        %681 = vmatpush1.msra.mxu0 0.0
        %682 = vmatprep.subr.mxu0 0.0
        %683 = vmatpush1.msra.mxu0 0.0
        %684 = vmatprep.subr.mxu0 0.0
        %685 = vmatpush1.msra.mxu0 0.0
        %686 = vmatprep.subr.mxu0 0.0
        %687 = vmatpush1.msra.mxu0 0.0
        %688 = vmatprep.subr.mxu0 0.0
        %689 = vmatpush1.msra.mxu0 0.0
        %690 = vmatprep.subr.mxu0 0.0
        %691 = vmatpush1.msra.mxu0 0.0
        %692 = vmatprep.subr.mxu0 0.0
        %693 = vmatpush1.msra.mxu0 0.0
        %694 = vmatprep.mubr.f32.mxu0 0.0
        %v695 = vand.u32 %v289, 4294901760
        %696 = vmatmul.mubr.f32.gmra.mrb[0].mxu0 %v695
        %v697 = vpop.f32.mrb[0].mxu0
        %v698 = vadd.f32 %v615, %v697
        %v699 = vpop.f32.mrb[0].mxu0
        %700 = vdwg.mxu0
        %701 = vmatprep.subr.mxu0 0.0
        %v702 = vand.u32 %v276, 4294901760
        %703 = vmatpush1.msra.mxu0 %v702
        %704 = vmatprep.subr.mxu0 0.0
        %v705 = vand.u32 %v277, 4294901760
        %706 = vmatpush1.msra.mxu0 %v705
        %707 = vmatprep.subr.mxu0 0.0
        %v708 = vand.u32 %v278, 4294901760
        %709 = vmatpush1.msra.mxu0 %v708
        %710 = vmatprep.subr.mxu0 0.0
        %v711 = vand.u32 %v279, 4294901760
        %712 = vmatpush1.msra.mxu0 %v711
        %713 = vmatprep.subr.mxu0 0.0
        %714 = vmatpush1.msra.mxu0 0.0
        %715 = vmatprep.subr.mxu0 0.0
        %716 = vmatpush1.msra.mxu0 0.0
        %717 = vmatprep.subr.mxu0 0.0
        %718 = vmatpush1.msra.mxu0 0.0
        %719 = vmatprep.subr.mxu0 0.0
        %720 = vmatpush1.msra.mxu0 0.0
        %721 = vmatprep.subr.mxu0 0.0
        %722 = vmatpush1.msra.mxu0 0.0
        %723 = vmatprep.subr.mxu0 0.0
        %724 = vmatpush1.msra.mxu0 0.0
        %725 = vmatprep.subr.mxu0 0.0
        %726 = vmatpush1.msra.mxu0 0.0
        %727 = vmatprep.subr.mxu0 0.0
        %728 = vmatpush1.msra.mxu0 0.0
        %729 = vmatprep.subr.mxu0 0.0
        %730 = vmatpush1.msra.mxu0 0.0
        %731 = vmatprep.subr.mxu0 0.0
        %732 = vmatpush1.msra.mxu0 0.0
        %733 = vmatprep.subr.mxu0 0.0
        %734 = vmatpush1.msra.mxu0 0.0
        %735 = vmatprep.subr.mxu0 0.0
        %736 = vmatpush1.msra.mxu0 0.0
        %737 = vmatprep.subr.mxu0 0.0
        %738 = vmatpush1.msra.mxu0 0.0
        %739 = vmatprep.subr.mxu0 0.0
        %740 = vmatpush1.msra.mxu0 0.0
        %741 = vmatprep.subr.mxu0 0.0
        %742 = vmatpush1.msra.mxu0 0.0
        %743 = vmatprep.subr.mxu0 0.0
        %744 = vmatpush1.msra.mxu0 0.0
        %745 = vmatprep.subr.mxu0 0.0
        %746 = vmatpush1.msra.mxu0 0.0
        %747 = vmatprep.subr.mxu0 0.0
        %748 = vmatpush1.msra.mxu0 0.0
        %749 = vmatprep.subr.mxu0 0.0
        %750 = vmatpush1.msra.mxu0 0.0
        %751 = vmatprep.subr.mxu0 0.0
        %752 = vmatpush1.msra.mxu0 0.0
        %753 = vmatprep.subr.mxu0 0.0
        %754 = vmatpush1.msra.mxu0 0.0
        %755 = vmatprep.subr.mxu0 0.0
        %756 = vmatpush1.msra.mxu0 0.0
        %757 = vmatprep.subr.mxu0 0.0
        %758 = vmatpush1.msra.mxu0 0.0
        %759 = vmatprep.subr.mxu0 0.0
        %760 = vmatpush1.msra.mxu0 0.0
        %761 = vmatprep.subr.mxu0 0.0
        %762 = vmatpush1.msra.mxu0 0.0
        %763 = vmatprep.subr.mxu0 0.0
        %764 = vmatpush1.msra.mxu0 0.0
        %765 = vmatprep.subr.mxu0 0.0
        %766 = vmatpush1.msra.mxu0 0.0
        %767 = vmatprep.subr.mxu0 0.0
        %768 = vmatpush1.msra.mxu0 0.0
        %769 = vmatprep.mubr.f32.mxu0 0.0
        %v770 = vand.u32 %v289, 4294901760
        %771 = vmatmul.mubr.f32.gmra.mrb[0].mxu0 %v770
        %v772 = vpop.f32.mrb[0].mxu0
        %v773 = vadd.f32 %v698, %v772
        %v774 = vpop.f32.mrb[0].mxu0
        %775 = vdwg.mxu0
        %v776 = vmax.f32 %v773, 0.0
        %v777 = vld [vmem:[%s3] sm:$0xff]
        %v778 = vld [vmem:[%s3 + $0x8] sm:$0xff]
        %v779 = vld [vmem:[%s3 + $0x10] sm:$0xff]
        %v780 = vld [vmem:[%s3 + $0x18] sm:$0xff]
        %v781 = vld [vmem:[%s3 + $0x20] sm:$0xff]
        %v782 = vld [vmem:[%s3 + $0x28] sm:$0xff]
        %v783 = vld [vmem:[%s3 + $0x30] sm:$0xff]
        %v784 = vld [vmem:[%s3 + $0x38] sm:$0xff]
        %v785 = vld [vmem:[%s4] sm:$0x1]
        %v787 = vlaneseq
        %v788 = vshrl.u32 %v787, 7
        %v789 = vsub.s32 0, %v788
        %v790 = vrot.slane %v785, %v789
        %vm792 = vcmask 523264
        %v794 = vsel %vm792, %v776, 0
        %796 = vmatprep.subr.mxu0 0.0
        %v797 = vand.u32 %v777, 4294901760
        %798 = vmatpush1.msra.mxu0 %v797
        %799 = vmatprep.subr.mxu0 0.0
        %v800 = vand.u32 %v778, 4294901760
        %801 = vmatpush1.msra.mxu0 %v800
        %802 = vmatprep.subr.mxu0 0.0
        %v803 = vand.u32 %v779, 4294901760
        %804 = vmatpush1.msra.mxu0 %v803
        %805 = vmatprep.subr.mxu0 0.0
        %v806 = vand.u32 %v780, 4294901760
        %807 = vmatpush1.msra.mxu0 %v806
        %808 = vmatprep.subr.mxu0 0.0
        %v809 = vand.u32 %v781, 4294901760
        %810 = vmatpush1.msra.mxu0 %v809
        %811 = vmatprep.subr.mxu0 0.0
        %v812 = vand.u32 %v782, 4294901760
        %813 = vmatpush1.msra.mxu0 %v812
        %814 = vmatprep.subr.mxu0 0.0
        %v815 = vand.u32 %v783, 4294901760
        %816 = vmatpush1.msra.mxu0 %v815
        %817 = vmatprep.subr.mxu0 0.0
        %v818 = vand.u32 %v784, 4294901760
        %819 = vmatpush1.msra.mxu0 %v818
        %820 = vmatprep.subr.mxu0 0.0
        %821 = vmatpush1.msra.mxu0 0.0
        %822 = vmatprep.subr.mxu0 0.0
        %823 = vmatpush1.msra.mxu0 0.0
        %824 = vmatprep.subr.mxu0 0.0
        %825 = vmatpush1.msra.mxu0 0.0
        %826 = vmatprep.subr.mxu0 0.0
        %827 = vmatpush1.msra.mxu0 0.0
        %828 = vmatprep.subr.mxu0 0.0
        %829 = vmatpush1.msra.mxu0 0.0
        %830 = vmatprep.subr.mxu0 0.0
        %831 = vmatpush1.msra.mxu0 0.0
        %832 = vmatprep.subr.mxu0 0.0
        %833 = vmatpush1.msra.mxu0 0.0
        %834 = vmatprep.subr.mxu0 0.0
        %835 = vmatpush1.msra.mxu0 0.0
        %836 = vmatprep.subr.mxu0 0.0
        %837 = vmatpush1.msra.mxu0 0.0
        %838 = vmatprep.subr.mxu0 0.0
        %839 = vmatpush1.msra.mxu0 0.0
        %840 = vmatprep.subr.mxu0 0.0
        %841 = vmatpush1.msra.mxu0 0.0
        %842 = vmatprep.subr.mxu0 0.0
        %843 = vmatpush1.msra.mxu0 0.0
        %844 = vmatprep.subr.mxu0 0.0
        %845 = vmatpush1.msra.mxu0 0.0
        %846 = vmatprep.subr.mxu0 0.0
        %847 = vmatpush1.msra.mxu0 0.0
        %848 = vmatprep.subr.mxu0 0.0
        %849 = vmatpush1.msra.mxu0 0.0
        %850 = vmatprep.subr.mxu0 0.0
        %851 = vmatpush1.msra.mxu0 0.0
        %852 = vmatprep.subr.mxu0 0.0
        %853 = vmatpush1.msra.mxu0 0.0
        %854 = vmatprep.subr.mxu0 0.0
        %855 = vmatpush1.msra.mxu0 0.0
        %856 = vmatprep.subr.mxu0 0.0
        %857 = vmatpush1.msra.mxu0 0.0
        %858 = vmatprep.subr.mxu0 0.0
        %859 = vmatpush1.msra.mxu0 0.0
        %860 = vmatprep.subr.mxu0 0.0
        %861 = vmatpush1.msra.mxu0 0.0
        %862 = vmatprep.subr.mxu0 0.0
        %863 = vmatpush1.msra.mxu0 0.0
        %864 = vmatprep.subr.mxu0 0.0
        %865 = vmatpush1.msra.mxu0 0.0
        %866 = vmatprep.subr.mxu0 0.0
        %867 = vmatpush1.msra.mxu0 0.0
        %868 = vmatprep.mubr.f32.mxu0 0.0
        %v869 = vand.u32 %v794, 4294901760
        %v870 = vsub.f32 %v794, %v869
        %v871 = vand.u32 %v870, 4294901760
        %v872 = vsub.f32 %v870, %v871
        %v873 = vand.u32 %v872, 4294901760
        %874 = vmatmul.mubr.f32.gmra.mrb[0].mxu0 %v873
        %v875 = vpop.f32.mrb[0].mxu0
        %v876 = vadd.f32 %v790, %v875
        %v877 = vpop.f32.mrb[0].mxu0
        %878 = vdwg.mxu0
        %879 = vmatprep.subr.mxu0 0.0
        %v880 = vand.u32 %v777, 4294901760
        %v881 = vsub.f32 %v777, %v880
        %v882 = vand.u32 %v881, 4294901760
        %v883 = vsub.f32 %v881, %v882
        %v884 = vand.u32 %v883, 4294901760
        %885 = vmatpush1.msra.mxu0 %v884
        %886 = vmatprep.subr.mxu0 0.0
        %v887 = vand.u32 %v778, 4294901760
        %v888 = vsub.f32 %v778, %v887
        %v889 = vand.u32 %v888, 4294901760
        %v890 = vsub.f32 %v888, %v889
        %v891 = vand.u32 %v890, 4294901760
        %892 = vmatpush1.msra.mxu0 %v891
        %893 = vmatprep.subr.mxu0 0.0
        %v894 = vand.u32 %v779, 4294901760
        %v895 = vsub.f32 %v779, %v894
        %v896 = vand.u32 %v895, 4294901760
        %v897 = vsub.f32 %v895, %v896
        %v898 = vand.u32 %v897, 4294901760
        %899 = vmatpush1.msra.mxu0 %v898
        %900 = vmatprep.subr.mxu0 0.0
        %v901 = vand.u32 %v780, 4294901760
        %v902 = vsub.f32 %v780, %v901
        %v903 = vand.u32 %v902, 4294901760
        %v904 = vsub.f32 %v902, %v903
        %v905 = vand.u32 %v904, 4294901760
        %906 = vmatpush1.msra.mxu0 %v905
        %907 = vmatprep.subr.mxu0 0.0
        %v908 = vand.u32 %v781, 4294901760
        %v909 = vsub.f32 %v781, %v908
        %v910 = vand.u32 %v909, 4294901760
        %v911 = vsub.f32 %v909, %v910
        %v912 = vand.u32 %v911, 4294901760
        %913 = vmatpush1.msra.mxu0 %v912
        %914 = vmatprep.subr.mxu0 0.0
        %v915 = vand.u32 %v782, 4294901760
        %v916 = vsub.f32 %v782, %v915
        %v917 = vand.u32 %v916, 4294901760
        %v918 = vsub.f32 %v916, %v917
        %v919 = vand.u32 %v918, 4294901760
        %920 = vmatpush1.msra.mxu0 %v919
        %921 = vmatprep.subr.mxu0 0.0
        %v922 = vand.u32 %v783, 4294901760
        %v923 = vsub.f32 %v783, %v922
        %v924 = vand.u32 %v923, 4294901760
        %v925 = vsub.f32 %v923, %v924
        %v926 = vand.u32 %v925, 4294901760
        %927 = vmatpush1.msra.mxu0 %v926
        %928 = vmatprep.subr.mxu0 0.0
        %v929 = vand.u32 %v784, 4294901760
        %v930 = vsub.f32 %v784, %v929
        %v931 = vand.u32 %v930, 4294901760
        %v932 = vsub.f32 %v930, %v931
        %v933 = vand.u32 %v932, 4294901760
        %934 = vmatpush1.msra.mxu0 %v933
        %935 = vmatprep.subr.mxu0 0.0
        %936 = vmatpush1.msra.mxu0 0.0
        %937 = vmatprep.subr.mxu0 0.0
        %938 = vmatpush1.msra.mxu0 0.0
        %939 = vmatprep.subr.mxu0 0.0
        %940 = vmatpush1.msra.mxu0 0.0
        %941 = vmatprep.subr.mxu0 0.0
        %942 = vmatpush1.msra.mxu0 0.0
        %943 = vmatprep.subr.mxu0 0.0
        %944 = vmatpush1.msra.mxu0 0.0
        %945 = vmatprep.subr.mxu0 0.0
        %946 = vmatpush1.msra.mxu0 0.0
        %947 = vmatprep.subr.mxu0 0.0
        %948 = vmatpush1.msra.mxu0 0.0
        %949 = vmatprep.subr.mxu0 0.0
        %950 = vmatpush1.msra.mxu0 0.0
        %951 = vmatprep.subr.mxu0 0.0
        %952 = vmatpush1.msra.mxu0 0.0
        %953 = vmatprep.subr.mxu0 0.0
        %954 = vmatpush1.msra.mxu0 0.0
        %955 = vmatprep.subr.mxu0 0.0
        %956 = vmatpush1.msra.mxu0 0.0
        %957 = vmatprep.subr.mxu0 0.0
        %958 = vmatpush1.msra.mxu0 0.0
        %959 = vmatprep.subr.mxu0 0.0
        %960 = vmatpush1.msra.mxu0 0.0
        %961 = vmatprep.subr.mxu0 0.0
        %962 = vmatpush1.msra.mxu0 0.0
        %963 = vmatprep.subr.mxu0 0.0
        %964 = vmatpush1.msra.mxu0 0.0
        %965 = vmatprep.subr.mxu0 0.0
        %966 = vmatpush1.msra.mxu0 0.0
        %967 = vmatprep.subr.mxu0 0.0
        %968 = vmatpush1.msra.mxu0 0.0
        %969 = vmatprep.subr.mxu0 0.0
        %970 = vmatpush1.msra.mxu0 0.0
        %971 = vmatprep.subr.mxu0 0.0
        %972 = vmatpush1.msra.mxu0 0.0
        %973 = vmatprep.subr.mxu0 0.0
        %974 = vmatpush1.msra.mxu0 0.0
        %975 = vmatprep.subr.mxu0 0.0
        %976 = vmatpush1.msra.mxu0 0.0
        %977 = vmatprep.subr.mxu0 0.0
        %978 = vmatpush1.msra.mxu0 0.0
        %979 = vmatprep.subr.mxu0 0.0
        %980 = vmatpush1.msra.mxu0 0.0
        %981 = vmatprep.subr.mxu0 0.0
        %982 = vmatpush1.msra.mxu0 0.0
        %983 = vmatprep.mubr.f32.mxu0 0.0
        %v984 = vand.u32 %v794, 4294901760
        %985 = vmatmul.mubr.f32.gmra.mrb[0].mxu0 %v984
        %v986 = vpop.f32.mrb[0].mxu0
        %v987 = vadd.f32 %v876, %v986
        %v988 = vpop.f32.mrb[0].mxu0
        %989 = vdwg.mxu0
        %990 = vmatprep.subr.mxu0 0.0
        %v991 = vand.u32 %v777, 4294901760
        %v992 = vsub.f32 %v777, %v991
        %993 = vmatpush1.msra.mxu0 %v992
        %994 = vmatprep.subr.mxu0 0.0
        %v995 = vand.u32 %v778, 4294901760
        %v996 = vsub.f32 %v778, %v995
        %997 = vmatpush1.msra.mxu0 %v996
        %998 = vmatprep.subr.mxu0 0.0
        %v999 = vand.u32 %v779, 4294901760
        %v1000 = vsub.f32 %v779, %v999
        %1001 = vmatpush1.msra.mxu0 %v1000
        %1002 = vmatprep.subr.mxu0 0.0
        %v1003 = vand.u32 %v780, 4294901760
        %v1004 = vsub.f32 %v780, %v1003
        %1005 = vmatpush1.msra.mxu0 %v1004
        %1006 = vmatprep.subr.mxu0 0.0
        %v1007 = vand.u32 %v781, 4294901760
        %v1008 = vsub.f32 %v781, %v1007
        %1009 = vmatpush1.msra.mxu0 %v1008
        %1010 = vmatprep.subr.mxu0 0.0
        %v1011 = vand.u32 %v782, 4294901760
        %v1012 = vsub.f32 %v782, %v1011
        %1013 = vmatpush1.msra.mxu0 %v1012
        %1014 = vmatprep.subr.mxu0 0.0
        %v1015 = vand.u32 %v783, 4294901760
        %v1016 = vsub.f32 %v783, %v1015
        %1017 = vmatpush1.msra.mxu0 %v1016
        %1018 = vmatprep.subr.mxu0 0.0
        %v1019 = vand.u32 %v784, 4294901760
        %v1020 = vsub.f32 %v784, %v1019
        %1021 = vmatpush1.msra.mxu0 %v1020
        %1022 = vmatprep.subr.mxu0 0.0
        %1023 = vmatpush1.msra.mxu0 0.0
        %1024 = vmatprep.subr.mxu0 0.0
        %1025 = vmatpush1.msra.mxu0 0.0
        %1026 = vmatprep.subr.mxu0 0.0
        %1027 = vmatpush1.msra.mxu0 0.0
        %1028 = vmatprep.subr.mxu0 0.0
        %1029 = vmatpush1.msra.mxu0 0.0
        %1030 = vmatprep.subr.mxu0 0.0
        %1031 = vmatpush1.msra.mxu0 0.0
        %1032 = vmatprep.subr.mxu0 0.0
        %1033 = vmatpush1.msra.mxu0 0.0
        %1034 = vmatprep.subr.mxu0 0.0
        %1035 = vmatpush1.msra.mxu0 0.0
        %1036 = vmatprep.subr.mxu0 0.0
        %1037 = vmatpush1.msra.mxu0 0.0
        %1038 = vmatprep.subr.mxu0 0.0
        %1039 = vmatpush1.msra.mxu0 0.0
        %1040 = vmatprep.subr.mxu0 0.0
        %1041 = vmatpush1.msra.mxu0 0.0
        %1042 = vmatprep.subr.mxu0 0.0
        %1043 = vmatpush1.msra.mxu0 0.0
        %1044 = vmatprep.subr.mxu0 0.0
        %1045 = vmatpush1.msra.mxu0 0.0
        %1046 = vmatprep.subr.mxu0 0.0
        %1047 = vmatpush1.msra.mxu0 0.0
        %1048 = vmatprep.subr.mxu0 0.0
        %1049 = vmatpush1.msra.mxu0 0.0
        %1050 = vmatprep.subr.mxu0 0.0
        %1051 = vmatpush1.msra.mxu0 0.0
        %1052 = vmatprep.subr.mxu0 0.0
        %1053 = vmatpush1.msra.mxu0 0.0
        %1054 = vmatprep.subr.mxu0 0.0
        %1055 = vmatpush1.msra.mxu0 0.0
        %1056 = vmatprep.subr.mxu0 0.0
        %1057 = vmatpush1.msra.mxu0 0.0
        %1058 = vmatprep.subr.mxu0 0.0
        %1059 = vmatpush1.msra.mxu0 0.0
        %1060 = vmatprep.subr.mxu0 0.0
        %1061 = vmatpush1.msra.mxu0 0.0
        %1062 = vmatprep.subr.mxu0 0.0
        %1063 = vmatpush1.msra.mxu0 0.0
        %1064 = vmatprep.subr.mxu0 0.0
        %1065 = vmatpush1.msra.mxu0 0.0
        %1066 = vmatprep.subr.mxu0 0.0
        %1067 = vmatpush1.msra.mxu0 0.0
        %1068 = vmatprep.subr.mxu0 0.0
        %1069 = vmatpush1.msra.mxu0 0.0
        %1070 = vmatprep.mubr.f32.mxu0 0.0
        %v1071 = vand.u32 %v794, 4294901760
        %v1072 = vsub.f32 %v794, %v1071
        %1073 = vmatmul.mubr.f32.gmra.mrb[0].mxu0 %v1072
        %v1074 = vpop.f32.mrb[0].mxu0
        %v1075 = vadd.f32 %v987, %v1074
        %v1076 = vpop.f32.mrb[0].mxu0
        %1077 = vdwg.mxu0
        %1078 = vmatprep.subr.mxu0 0.0
        %v1079 = vand.u32 %v777, 4294901760
        %1080 = vmatpush1.msra.mxu0 %v1079
        %1081 = vmatprep.subr.mxu0 0.0
        %v1082 = vand.u32 %v778, 4294901760
        %1083 = vmatpush1.msra.mxu0 %v1082
        %1084 = vmatprep.subr.mxu0 0.0
        %v1085 = vand.u32 %v779, 4294901760
        %1086 = vmatpush1.msra.mxu0 %v1085
        %1087 = vmatprep.subr.mxu0 0.0
        %v1088 = vand.u32 %v780, 4294901760
        %1089 = vmatpush1.msra.mxu0 %v1088
        %1090 = vmatprep.subr.mxu0 0.0
        %v1091 = vand.u32 %v781, 4294901760
        %1092 = vmatpush1.msra.mxu0 %v1091
        %1093 = vmatprep.subr.mxu0 0.0
        %v1094 = vand.u32 %v782, 4294901760
        %1095 = vmatpush1.msra.mxu0 %v1094
        %1096 = vmatprep.subr.mxu0 0.0
        %v1097 = vand.u32 %v783, 4294901760
        %1098 = vmatpush1.msra.mxu0 %v1097
        %1099 = vmatprep.subr.mxu0 0.0
        %v1100 = vand.u32 %v784, 4294901760
        %1101 = vmatpush1.msra.mxu0 %v1100
        %1102 = vmatprep.subr.mxu0 0.0
        %1103 = vmatpush1.msra.mxu0 0.0
        %1104 = vmatprep.subr.mxu0 0.0
        %1105 = vmatpush1.msra.mxu0 0.0
        %1106 = vmatprep.subr.mxu0 0.0
        %1107 = vmatpush1.msra.mxu0 0.0
        %1108 = vmatprep.subr.mxu0 0.0
        %1109 = vmatpush1.msra.mxu0 0.0
        %1110 = vmatprep.subr.mxu0 0.0
        %1111 = vmatpush1.msra.mxu0 0.0
        %1112 = vmatprep.subr.mxu0 0.0
        %1113 = vmatpush1.msra.mxu0 0.0
        %1114 = vmatprep.subr.mxu0 0.0
        %1115 = vmatpush1.msra.mxu0 0.0
        %1116 = vmatprep.subr.mxu0 0.0
        %1117 = vmatpush1.msra.mxu0 0.0
        %1118 = vmatprep.subr.mxu0 0.0
        %1119 = vmatpush1.msra.mxu0 0.0
        %1120 = vmatprep.subr.mxu0 0.0
        %1121 = vmatpush1.msra.mxu0 0.0
        %1122 = vmatprep.subr.mxu0 0.0
        %1123 = vmatpush1.msra.mxu0 0.0
        %1124 = vmatprep.subr.mxu0 0.0
        %1125 = vmatpush1.msra.mxu0 0.0
        %1126 = vmatprep.subr.mxu0 0.0
        %1127 = vmatpush1.msra.mxu0 0.0
        %1128 = vmatprep.subr.mxu0 0.0
        %1129 = vmatpush1.msra.mxu0 0.0
        %1130 = vmatprep.subr.mxu0 0.0
        %1131 = vmatpush1.msra.mxu0 0.0
        %1132 = vmatprep.subr.mxu0 0.0
        %1133 = vmatpush1.msra.mxu0 0.0
        %1134 = vmatprep.subr.mxu0 0.0
        %1135 = vmatpush1.msra.mxu0 0.0
        %1136 = vmatprep.subr.mxu0 0.0
        %1137 = vmatpush1.msra.mxu0 0.0
        %1138 = vmatprep.subr.mxu0 0.0
        %1139 = vmatpush1.msra.mxu0 0.0
        %1140 = vmatprep.subr.mxu0 0.0
        %1141 = vmatpush1.msra.mxu0 0.0
        %1142 = vmatprep.subr.mxu0 0.0
        %1143 = vmatpush1.msra.mxu0 0.0
        %1144 = vmatprep.subr.mxu0 0.0
        %1145 = vmatpush1.msra.mxu0 0.0
        %1146 = vmatprep.subr.mxu0 0.0
        %1147 = vmatpush1.msra.mxu0 0.0
        %1148 = vmatprep.subr.mxu0 0.0
        %1149 = vmatpush1.msra.mxu0 0.0
        %1150 = vmatprep.mubr.f32.mxu0 0.0
        %v1151 = vand.u32 %v794, 4294901760
        %v1152 = vsub.f32 %v794, %v1151
        %v1153 = vand.u32 %v1152, 4294901760
        %1154 = vmatmul.mubr.f32.gmra.mrb[0].mxu0 %v1153
        %v1155 = vpop.f32.mrb[0].mxu0
        %v1156 = vadd.f32 %v1075, %v1155
        %v1157 = vpop.f32.mrb[0].mxu0
        %1158 = vdwg.mxu0
        %1159 = vmatprep.subr.mxu0 0.0
        %v1160 = vand.u32 %v777, 4294901760
        %v1161 = vsub.f32 %v777, %v1160
        %v1162 = vand.u32 %v1161, 4294901760
        %1163 = vmatpush1.msra.mxu0 %v1162
        %1164 = vmatprep.subr.mxu0 0.0
        %v1165 = vand.u32 %v778, 4294901760
        %v1166 = vsub.f32 %v778, %v1165
        %v1167 = vand.u32 %v1166, 4294901760
        %1168 = vmatpush1.msra.mxu0 %v1167
        %1169 = vmatprep.subr.mxu0 0.0
        %v1170 = vand.u32 %v779, 4294901760
        %v1171 = vsub.f32 %v779, %v1170
        %v1172 = vand.u32 %v1171, 4294901760
        %1173 = vmatpush1.msra.mxu0 %v1172
        %1174 = vmatprep.subr.mxu0 0.0
        %v1175 = vand.u32 %v780, 4294901760
        %v1176 = vsub.f32 %v780, %v1175
        %v1177 = vand.u32 %v1176, 4294901760
        %1178 = vmatpush1.msra.mxu0 %v1177
        %1179 = vmatprep.subr.mxu0 0.0
        %v1180 = vand.u32 %v781, 4294901760
        %v1181 = vsub.f32 %v781, %v1180
        %v1182 = vand.u32 %v1181, 4294901760
        %1183 = vmatpush1.msra.mxu0 %v1182
        %1184 = vmatprep.subr.mxu0 0.0
        %v1185 = vand.u32 %v782, 4294901760
        %v1186 = vsub.f32 %v782, %v1185
        %v1187 = vand.u32 %v1186, 4294901760
        %1188 = vmatpush1.msra.mxu0 %v1187
        %1189 = vmatprep.subr.mxu0 0.0
        %v1190 = vand.u32 %v783, 4294901760
        %v1191 = vsub.f32 %v783, %v1190
        %v1192 = vand.u32 %v1191, 4294901760
        %1193 = vmatpush1.msra.mxu0 %v1192
        %1194 = vmatprep.subr.mxu0 0.0
        %v1195 = vand.u32 %v784, 4294901760
        %v1196 = vsub.f32 %v784, %v1195
        %v1197 = vand.u32 %v1196, 4294901760
        %1198 = vmatpush1.msra.mxu0 %v1197
        %1199 = vmatprep.subr.mxu0 0.0
        %1200 = vmatpush1.msra.mxu0 0.0
        %1201 = vmatprep.subr.mxu0 0.0
        %1202 = vmatpush1.msra.mxu0 0.0
        %1203 = vmatprep.subr.mxu0 0.0
        %1204 = vmatpush1.msra.mxu0 0.0
        %1205 = vmatprep.subr.mxu0 0.0
        %1206 = vmatpush1.msra.mxu0 0.0
        %1207 = vmatprep.subr.mxu0 0.0
        %1208 = vmatpush1.msra.mxu0 0.0
        %1209 = vmatprep.subr.mxu0 0.0
        %1210 = vmatpush1.msra.mxu0 0.0
        %1211 = vmatprep.subr.mxu0 0.0
        %1212 = vmatpush1.msra.mxu0 0.0
        %1213 = vmatprep.subr.mxu0 0.0
        %1214 = vmatpush1.msra.mxu0 0.0
        %1215 = vmatprep.subr.mxu0 0.0
        %1216 = vmatpush1.msra.mxu0 0.0
        %1217 = vmatprep.subr.mxu0 0.0
        %1218 = vmatpush1.msra.mxu0 0.0
        %1219 = vmatprep.subr.mxu0 0.0
        %1220 = vmatpush1.msra.mxu0 0.0
        %1221 = vmatprep.subr.mxu0 0.0
        %1222 = vmatpush1.msra.mxu0 0.0
        %1223 = vmatprep.subr.mxu0 0.0
        %1224 = vmatpush1.msra.mxu0 0.0
        %1225 = vmatprep.subr.mxu0 0.0
        %1226 = vmatpush1.msra.mxu0 0.0
        %1227 = vmatprep.subr.mxu0 0.0
        %1228 = vmatpush1.msra.mxu0 0.0
        %1229 = vmatprep.subr.mxu0 0.0
        %1230 = vmatpush1.msra.mxu0 0.0
        %1231 = vmatprep.subr.mxu0 0.0
        %1232 = vmatpush1.msra.mxu0 0.0
        %1233 = vmatprep.subr.mxu0 0.0
        %1234 = vmatpush1.msra.mxu0 0.0
        %1235 = vmatprep.subr.mxu0 0.0
        %1236 = vmatpush1.msra.mxu0 0.0
        %1237 = vmatprep.subr.mxu0 0.0
        %1238 = vmatpush1.msra.mxu0 0.0
        %1239 = vmatprep.subr.mxu0 0.0
        %1240 = vmatpush1.msra.mxu0 0.0
        %1241 = vmatprep.subr.mxu0 0.0
        %1242 = vmatpush1.msra.mxu0 0.0
        %1243 = vmatprep.subr.mxu0 0.0
        %1244 = vmatpush1.msra.mxu0 0.0
        %1245 = vmatprep.subr.mxu0 0.0
        %1246 = vmatpush1.msra.mxu0 0.0
        %1247 = vmatprep.mubr.f32.mxu0 0.0
        %v1248 = vand.u32 %v794, 4294901760
        %1249 = vmatmul.mubr.f32.gmra.mrb[0].mxu0 %v1248
        %v1250 = vpop.f32.mrb[0].mxu0
        %v1251 = vadd.f32 %v1156, %v1250
        %v1252 = vpop.f32.mrb[0].mxu0
        %1253 = vdwg.mxu0
        %1254 = vmatprep.subr.mxu0 0.0
        %v1255 = vand.u32 %v777, 4294901760
        %1256 = vmatpush1.msra.mxu0 %v1255
        %1257 = vmatprep.subr.mxu0 0.0
        %v1258 = vand.u32 %v778, 4294901760
        %1259 = vmatpush1.msra.mxu0 %v1258
        %1260 = vmatprep.subr.mxu0 0.0
        %v1261 = vand.u32 %v779, 4294901760
        %1262 = vmatpush1.msra.mxu0 %v1261
        %1263 = vmatprep.subr.mxu0 0.0
        %v1264 = vand.u32 %v780, 4294901760
        %1265 = vmatpush1.msra.mxu0 %v1264
        %1266 = vmatprep.subr.mxu0 0.0
        %v1267 = vand.u32 %v781, 4294901760
        %1268 = vmatpush1.msra.mxu0 %v1267
        %1269 = vmatprep.subr.mxu0 0.0
        %v1270 = vand.u32 %v782, 4294901760
        %1271 = vmatpush1.msra.mxu0 %v1270
        %1272 = vmatprep.subr.mxu0 0.0
        %v1273 = vand.u32 %v783, 4294901760
        %1274 = vmatpush1.msra.mxu0 %v1273
        %1275 = vmatprep.subr.mxu0 0.0
        %v1276 = vand.u32 %v784, 4294901760
        %1277 = vmatpush1.msra.mxu0 %v1276
        %1278 = vmatprep.subr.mxu0 0.0
        %1279 = vmatpush1.msra.mxu0 0.0
        %1280 = vmatprep.subr.mxu0 0.0
        %1281 = vmatpush1.msra.mxu0 0.0
        %1282 = vmatprep.subr.mxu0 0.0
        %1283 = vmatpush1.msra.mxu0 0.0
        %1284 = vmatprep.subr.mxu0 0.0
        %1285 = vmatpush1.msra.mxu0 0.0
        %1286 = vmatprep.subr.mxu0 0.0
        %1287 = vmatpush1.msra.mxu0 0.0
        %1288 = vmatprep.subr.mxu0 0.0
        %1289 = vmatpush1.msra.mxu0 0.0
        %1290 = vmatprep.subr.mxu0 0.0
        %1291 = vmatpush1.msra.mxu0 0.0
        %1292 = vmatprep.subr.mxu0 0.0
        %1293 = vmatpush1.msra.mxu0 0.0
        %1294 = vmatprep.subr.mxu0 0.0
        %1295 = vmatpush1.msra.mxu0 0.0
        %1296 = vmatprep.subr.mxu0 0.0
        %1297 = vmatpush1.msra.mxu0 0.0
        %1298 = vmatprep.subr.mxu0 0.0
        %1299 = vmatpush1.msra.mxu0 0.0
        %1300 = vmatprep.subr.mxu0 0.0
        %1301 = vmatpush1.msra.mxu0 0.0
        %1302 = vmatprep.subr.mxu0 0.0
        %1303 = vmatpush1.msra.mxu0 0.0
        %1304 = vmatprep.subr.mxu0 0.0
        %1305 = vmatpush1.msra.mxu0 0.0
        %1306 = vmatprep.subr.mxu0 0.0
        %1307 = vmatpush1.msra.mxu0 0.0
        %1308 = vmatprep.subr.mxu0 0.0
        %1309 = vmatpush1.msra.mxu0 0.0
        %1310 = vmatprep.subr.mxu0 0.0
        %1311 = vmatpush1.msra.mxu0 0.0
        %1312 = vmatprep.subr.mxu0 0.0
        %1313 = vmatpush1.msra.mxu0 0.0
        %1314 = vmatprep.subr.mxu0 0.0
        %1315 = vmatpush1.msra.mxu0 0.0
        %1316 = vmatprep.subr.mxu0 0.0
        %1317 = vmatpush1.msra.mxu0 0.0
        %1318 = vmatprep.subr.mxu0 0.0
        %1319 = vmatpush1.msra.mxu0 0.0
        %1320 = vmatprep.subr.mxu0 0.0
        %1321 = vmatpush1.msra.mxu0 0.0
        %1322 = vmatprep.subr.mxu0 0.0
        %1323 = vmatpush1.msra.mxu0 0.0
        %1324 = vmatprep.subr.mxu0 0.0
        %1325 = vmatpush1.msra.mxu0 0.0
        %1326 = vmatprep.mubr.f32.mxu0 0.0
        %v1327 = vand.u32 %v794, 4294901760
        %1328 = vmatmul.mubr.f32.gmra.mrb[0].mxu0 %v1327
        %v1329 = vpop.f32.mrb[0].mxu0
        %v1330 = vadd.f32 %v1251, %v1329
        %v1331 = vpop.f32.mrb[0].mxu0
        %1332 = vdwg.mxu0
        %v1333 = vld [vmem:[%s5] sm:$0x1]
        %v1335 = vlaneseq
        %v1336 = vshrl.u32 %v1335, 7
        %v1337 = vsub.s32 0, %v1336
        %v1338 = vrot.slane %v1333, %v1337
        %v1340 = vmul.f32 %v776, %v1338
        %v1341 = vsel %vm792, %v1340, 0.0
        %1342 = vadd.xlane.f32.xlu0 %v1341
        %v1343 = vpop.xlane.xlu0 %1342
        %s1344 = sld [smem:[#allocation2]]
        %v1345 = vstv %s1344
        %v1346 = vadd.f32 %v1343, %v1345
        %v1347 = vsub.f32 0.0, %v1346
        %v1348 = vmul.f32 %v1347, 1.442695
        %v1349 = vpow.pop %v1348
        %v1350 = vadd.f32 %v1349, 1.0
        %v1351 = vrcp.pop %v1350
        %v1352 = vmul.f32 1.0, %v1351
        %v1353 = vmul.f32 %v1352, %v1330
        %1354 = vst.msk [vmem:[%s270] sm:$0xff] %vm287, %v1353
        %s1355 = sand.u32 %s182, 1
        %s1356 = scalar_lea.sflag [#allocation4], %s1355
        %s1357 = sand.u32 %s182, 1
        %s1358 = smul.addr %s1357, 8
        %s1359 = scalar_lea.vmem [#allocation3], %s1358
        // Predicated region
        $region49: #{tpu_custom_call.1} parent=47 // pred_check
          %p1360 = pneg %p192
        $region50: #{tpu_custom_call.1} parent=47 // pred_check_branch
          %1362 = sbr.rel (%p1360) target = $region52
        $region51: #{tpu_custom_call.1} parent=47 // pred_region
          %s1364 = ssub.s32 128, 128
          %1365 = vsyncadd %s1356, %s1364
          %s1366 = smul.addr %s22, 128
          %s1367 = scalar_lea.hbm %s7, %s1366
          %s1369 = sshll.u32 %s1359, 4
          %s1370 = int_to_ptr.vmem [resolvable:$true] %s1369
          %1372 = dma.vmem_to_hbm [thread:$0]  %s1370, 128, %s1367, %s1356
        $region52: #{tpu_custom_call.1} parent=47 // pred_fallthru
          _
      $region48: #{tpu_custom_call.1} parent=5 // pred_fallthru
        _
      %p1373 = scmp.le.s32.totalorder 2, %s17
      // Predicated region
      $region53: #{tpu_custom_call.1} parent=5 // pred_check
        %p1374 = pneg %p1373
      $region54: #{tpu_custom_call.1} parent=5 // pred_check_branch
        %1376 = sbr.rel (%p1374) target = $region56
      $region55: #{tpu_custom_call.1} parent=5 // pred_region
        %s1377 = ssub.s32 %s17, 2
        // Predicated region
        $region57: #{tpu_custom_call.1} parent=55 // pred_check
          %p1378 = pneg %p198
        $region58: #{tpu_custom_call.1} parent=55 // pred_check_branch
          %1380 = sbr.rel (%p1378) target = $region60
        $region59: #{tpu_custom_call.1} parent=55 // pred_region
          %s1381 = sand.u32 %s183, 1
          %s1382 = scalar_lea.sflag [#allocation4], %s1381
          %s1383 = sand.u32 %s183, 1
          %s1384 = smul.addr %s1383, 8
          %s1385 = scalar_lea.vmem [#allocation3], %s1384
          %1386 = dma.done %s1382, 128
        $region60: #{tpu_custom_call.1} parent=55 // pred_fallthru
          _
      $region56: #{tpu_custom_call.1} parent=5 // pred_fallthru
        _
    $region6: #{tpu_custom_call.1} parent=1 // loop_footer
      %s21 = sadd.s32 1, %s17
    $region7: #{tpu_custom_call.1} parent=1 // loop_footer_branch
      %16 = sbr.rel target = $region3
    $region8: #{tpu_custom_call.1} parent=1 // loop_exit
      _
    %1387 = vsyncpa [#allocation4], 1
    %s1388 = scalar_lea.sflag [#allocation4], 1
    %1389 = vsyncpa %s1388, 1

// kernel: tpu_custom_call.1
$region0: #{tpu_custom_call.1}
  #allocation0 [shape = 'u32[]', space=smem, size = 0x4, offset = 0x4, fixed_abs, tag = 'smem constant byte address 0x4 - core index']
  #allocation1 [shape = 'u32[144,128]{1,0:T(1,128)}', space=vmem, size = 0x12000, scoped, tag = 'internal scratch']
  #allocation2 [shape = 'f32[1,1]{1,0:T(1,128)S(6)}', space=smem, size = 0x200, scoped, tag = 'scoped memory for tpu_custom_call.1']
  %s0 = inlined_call_operand.vmem [shape: f32[16,32], index: 0, kind: input, shape index: {}]
  %s1 = inlined_call_operand.vmem [shape: f32[32,64], index: 1, kind: input, shape index: {}]
  %s2 = inlined_call_operand.vmem [shape: f32[1,64], index: 2, kind: input, shape index: {}]
  %s3 = inlined_call_operand.vmem [shape: f32[64,32], index: 3, kind: input, shape index: {}]
  %s4 = inlined_call_operand.vmem [shape: f32[1,32], index: 4, kind: input, shape index: {}]
  %s5 = inlined_call_operand.vmem [shape: f32[1,64], index: 5, kind: input, shape index: {}]
  %s6 = inlined_call_operand.<no memory space> [shape: f32[1,1], index: 6, kind: input, shape index: {}]
  %s7 = inlined_call_operand.hbm [shape: f32[16,32], index: 7, kind: output, shape index: {}]
  %s8 = sld [smem:[#allocation0]]
  $region61: #{tpu_custom_call.1} parent=0
    _
  %s10 = ssub.s32 1, %s8
  %s11 = scalar_select 0, %s10, %s8
  %12 = sst [smem:[#allocation2]] %s6
  $region1: #{tpu_custom_call.1} parent=0
    #allocation3 [shape = 'u8[8192]{0}', space=vmem, size = 0x2000, scoped, tag = 'output window, operand 0']
    #allocation4 [shape = 's32[2]{0}', space=sflag, size = 0x8, scoped, tag = 'scoped memory for tpu_custom_call.1']
    %13 = vsyncpa [#allocation4], 0
    %s14 = scalar_lea.sflag [#allocation4], 1
    %15 = vsyncpa %s14, 0
    loop: start=0, step=1, limit=4
    $region2: #{tpu_custom_call.1} parent=1 // loop_pre_header
      _
    $region3: #{tpu_custom_call.1} parent=1 // loop_header
      %s17 = sphi 0, %s21
      %p18 = scmp.ge.s32.totalorder %s17, 4
      %s27 = sphi 0, %s29
      %s30 = sphi 0, %s27
      %s31 = sphi 0, %s30
      %s47 = sphi 0, %s31
      %s51 = sphi 0, %s51
      %s53 = sphi 0, %s51
      %s54 = sphi 0, %s53
      %s68 = sphi 0, %s54
      %s72 = sphi 0, %s72
      %s74 = sphi 0, %s72
      %s75 = sphi 0, %s74
      %s89 = sphi 0, %s75
      %s93 = sphi 0, %s93
      %s95 = sphi 0, %s93
      %s96 = sphi 0, %s95
      %s110 = sphi 0, %s96
      %s114 = sphi 0, %s114
      %s116 = sphi 0, %s114
      %s117 = sphi 0, %s116
      %s131 = sphi 0, %s117
      %s135 = sphi 0, %s135
      %s137 = sphi 0, %s135
      %s138 = sphi 0, %s137
      %s152 = sphi 0, %s138
      %s156 = sphi 0, %s156
      %s158 = sphi 0, %s156
      %s159 = sphi 0, %s158
      %s173 = sphi 0, %s159
      %s179 = sphi 0, %s181
      %s182 = sphi 0, %s179
      %s183 = sphi 0, %s182
      %s199 = sphi 0, %s183
    $region4: #{tpu_custom_call.1} parent=1 // loop_header_branch
      %20 = sbr.rel (%p18) target = $region8
    $region5: #{tpu_custom_call.1} parent=1 // loop_body
      %s22 = ssub.s32 %s17, 1
      %s23 = ssub.s32 %s17, 2
      %s24 = sadd.s32 %s17, 1
      %s25 = ssub.s32 %s17, %s24
      %p26 = scmp.eq.s32.totalorder %s25, 0
      %s28 = sadd.s32 %s27, 1
      %s29 = scalar_select %p26, %s27, %s28
      %p32 = pneg %p26
      %p33 = scmp.eq.s32.totalorder %s17, 1
      %p34 = por %p32, %p33
      %p35 = scmp.ne.s32.totalorder %s27, %s30
      %p36 = scmp.eq.s32.totalorder %s17, 0
      %p37 = por %p35, %p36
      %p38 = scmp.ne.s32.totalorder %s27, %s30
      %p39 = scmp.eq.s32.totalorder %s22, 1
      %p40 = por %p38, %p39
      %p41 = scmp.ne.s32.totalorder %s30, %s31
      %p42 = scmp.eq.s32.totalorder %s22, 0
      %p43 = por %p41, %p42
      %p44 = scmp.ne.s32.totalorder %s30, %s31
      %p45 = scmp.eq.s32.totalorder %s23, 1
      %p46 = por %p44, %p45
      %p48 = scmp.ne.s32.totalorder %s31, %s47
      %p49 = scmp.eq.s32.totalorder %s23, 0
      %p50 = por %p48, %p49
      %s52 = sadd.s32 %s51, 1
      %p55 = scmp.eq.s32.totalorder %s17, 1
      %p56 = scmp.ne.s32.totalorder %s51, %s53
      %p57 = scmp.eq.s32.totalorder %s17, 0
      %p58 = por %p56, %p57
      %p59 = scmp.ne.s32.totalorder %s51, %s53
      %p60 = scmp.eq.s32.totalorder %s22, 1
      %p61 = por %p59, %p60
      %p62 = scmp.ne.s32.totalorder %s53, %s54
      %p63 = scmp.eq.s32.totalorder %s22, 0
      %p64 = por %p62, %p63
      %p65 = scmp.ne.s32.totalorder %s53, %s54
      %p66 = scmp.eq.s32.totalorder %s23, 1
      %p67 = por %p65, %p66
      %p69 = scmp.ne.s32.totalorder %s54, %s68
      %p70 = scmp.eq.s32.totalorder %s23, 0
      %p71 = por %p69, %p70
      %s73 = sadd.s32 %s72, 1
      %p76 = scmp.eq.s32.totalorder %s17, 1
      %p77 = scmp.ne.s32.totalorder %s72, %s74
      %p78 = scmp.eq.s32.totalorder %s17, 0
      %p79 = por %p77, %p78
      %p80 = scmp.ne.s32.totalorder %s72, %s74
      %p81 = scmp.eq.s32.totalorder %s22, 1
      %p82 = por %p80, %p81
      %p83 = scmp.ne.s32.totalorder %s74, %s75
      %p84 = scmp.eq.s32.totalorder %s22, 0
      %p85 = por %p83, %p84
      %p86 = scmp.ne.s32.totalorder %s74, %s75
      %p87 = scmp.eq.s32.totalorder %s23, 1
      %p88 = por %p86, %p87
      %p90 = scmp.ne.s32.totalorder %s75, %s89
      %p91 = scmp.eq.s32.totalorder %s23, 0
      %p92 = por %p90, %p91
      %s94 = sadd.s32 %s93, 1
      %p97 = scmp.eq.s32.totalorder %s17, 1
      %p98 = scmp.ne.s32.totalorder %s93, %s95
      %p99 = scmp.eq.s32.totalorder %s17, 0
      %p100 = por %p98, %p99
      %p101 = scmp.ne.s32.totalorder %s93, %s95
      %p102 = scmp.eq.s32.totalorder %s22, 1
      %p103 = por %p101, %p102
      %p104 = scmp.ne.s32.totalorder %s95, %s96
      %p105 = scmp.eq.s32.totalorder %s22, 0
      %p106 = por %p104, %p105
      %p107 = scmp.ne.s32.totalorder %s95, %s96
      %p108 = scmp.eq.s32.totalorder %s23, 1
      %p109 = por %p107, %p108
      %p111 = scmp.ne.s32.totalorder %s96, %s110
      %p112 = scmp.eq.s32.totalorder %s23, 0
      %p113 = por %p111, %p112
      %s115 = sadd.s32 %s114, 1
      %p118 = scmp.eq.s32.totalorder %s17, 1
      %p119 = scmp.ne.s32.totalorder %s114, %s116
      %p120 = scmp.eq.s32.totalorder %s17, 0
      %p121 = por %p119, %p120
      %p122 = scmp.ne.s32.totalorder %s114, %s116
      %p123 = scmp.eq.s32.totalorder %s22, 1
      %p124 = por %p122, %p123
      %p125 = scmp.ne.s32.totalorder %s116, %s117
      %p126 = scmp.eq.s32.totalorder %s22, 0
      %p127 = por %p125, %p126
      %p128 = scmp.ne.s32.totalorder %s116, %s117
      %p129 = scmp.eq.s32.totalorder %s23, 1
      %p130 = por %p128, %p129
      %p132 = scmp.ne.s32.totalorder %s117, %s131
      %p133 = scmp.eq.s32.totalorder %s23, 0
      %p134 = por %p132, %p133
      %s136 = sadd.s32 %s135, 1
      %p139 = scmp.eq.s32.totalorder %s17, 1
      %p140 = scmp.ne.s32.totalorder %s135, %s137
      %p141 = scmp.eq.s32.totalorder %s17, 0
      %p142 = por %p140, %p141
      %p143 = scmp.ne.s32.totalorder %s135, %s137
      %p144 = scmp.eq.s32.totalorder %s22, 1
      %p145 = por %p143, %p144
      %p146 = scmp.ne.s32.totalorder %s137, %s138
      %p147 = scmp.eq.s32.totalorder %s22, 0
      %p148 = por %p146, %p147
      %p149 = scmp.ne.s32.totalorder %s137, %s138
      %p150 = scmp.eq.s32.totalorder %s23, 1
      %p151 = por %p149, %p150
      %p153 = scmp.ne.s32.totalorder %s138, %s152
      %p154 = scmp.eq.s32.totalorder %s23, 0
      %p155 = por %p153, %p154
      %s157 = sadd.s32 %s156, 1
      %p160 = scmp.eq.s32.totalorder %s17, 1
      %p161 = scmp.ne.s32.totalorder %s156, %s158
      %p162 = scmp.eq.s32.totalorder %s17, 0
      %p163 = por %p161, %p162
      %p164 = scmp.ne.s32.totalorder %s156, %s158
      %p165 = scmp.eq.s32.totalorder %s22, 1
      %p166 = por %p164, %p165
      %p167 = scmp.ne.s32.totalorder %s158, %s159
      %p168 = scmp.eq.s32.totalorder %s22, 0
      %p169 = por %p167, %p168
      %p170 = scmp.ne.s32.totalorder %s158, %s159
      %p171 = scmp.eq.s32.totalorder %s23, 1
      %p172 = por %p170, %p171
      %p174 = scmp.ne.s32.totalorder %s159, %s173
      %p175 = scmp.eq.s32.totalorder %s23, 0
      %p176 = por %p174, %p175
      %s177 = ssub.s32 %s17, %s24
      %p178 = scmp.eq.s32.totalorder %s177, 0
      %s180 = sadd.s32 %s179, 1
      %s181 = scalar_select %p178, %s179, %s180
      %p184 = pneg %p178
      %p185 = scmp.eq.s32.totalorder %s17, 1
      %p186 = por %p184, %p185
      %p187 = scmp.ne.s32.totalorder %s179, %s182
      %p188 = scmp.eq.s32.totalorder %s17, 0
      %p189 = por %p187, %p188
      %p190 = scmp.ne.s32.totalorder %s179, %s182
      %p191 = scmp.eq.s32.totalorder %s22, 1
      %p192 = por %p190, %p191
      %p193 = scmp.ne.s32.totalorder %s182, %s183
      %p194 = scmp.eq.s32.totalorder %s22, 0
      %p195 = por %p193, %p194
      %p196 = scmp.ne.s32.totalorder %s182, %s183
      %p197 = scmp.eq.s32.totalorder %s23, 1
      %p198 = por %p196, %p197
      %p200 = scmp.ne.s32.totalorder %s183, %s199
      %p201 = scmp.eq.s32.totalorder %s23, 0
      %p202 = por %p200, %p201
      %p203 = scmp.le.s32.totalorder 1, %s17
      %p204 = scmp.lt.s32.totalorder %s17, 3
      %p205 = pnand %p203, %p204
      %p206 = pneg %p205
      // Predicated region
      $region9: #{tpu_custom_call.1} parent=5 // pred_check
        _
      $region10: #{tpu_custom_call.1} parent=5 // pred_check_branch
        %208 = sbr.rel (%p205) target = $region12
      $region11: #{tpu_custom_call.1} parent=5 // pred_region
        %s209 = ssub.s32 %s17, 1
        // Predicated region
        $region13: #{tpu_custom_call.1} parent=11 // pred_check
          %p210 = pneg %p64
        $region14: #{tpu_custom_call.1} parent=11 // pred_check_branch
          %212 = sbr.rel (%p210) target = $region16
        $region15: #{tpu_custom_call.1} parent=11 // pred_region
          _
        $region16: #{tpu_custom_call.1} parent=11 // pred_fallthru
          _
        // Predicated region
        $region17: #{tpu_custom_call.1} parent=11 // pred_check
          %p213 = pneg %p85
        $region18: #{tpu_custom_call.1} parent=11 // pred_check_branch
          %215 = sbr.rel (%p213) target = $region20
        $region19: #{tpu_custom_call.1} parent=11 // pred_region
          _
        $region20: #{tpu_custom_call.1} parent=11 // pred_fallthru
          _
        // Predicated region
        $region21: #{tpu_custom_call.1} parent=11 // pred_check
          %p216 = pneg %p106
        $region22: #{tpu_custom_call.1} parent=11 // pred_check_branch
          %218 = sbr.rel (%p216) target = $region24
        $region23: #{tpu_custom_call.1} parent=11 // pred_region
          _
        $region24: #{tpu_custom_call.1} parent=11 // pred_fallthru
          _
        // Predicated region
        $region25: #{tpu_custom_call.1} parent=11 // pred_check
          %p219 = pneg %p127
        $region26: #{tpu_custom_call.1} parent=11 // pred_check_branch
          %221 = sbr.rel (%p219) target = $region28
        $region27: #{tpu_custom_call.1} parent=11 // pred_region
          _
        $region28: #{tpu_custom_call.1} parent=11 // pred_fallthru
          _
        // Predicated region
        $region29: #{tpu_custom_call.1} parent=11 // pred_check
          %p222 = pneg %p148
        $region30: #{tpu_custom_call.1} parent=11 // pred_check_branch
          %224 = sbr.rel (%p222) target = $region32
        $region31: #{tpu_custom_call.1} parent=11 // pred_region
          _
        $region32: #{tpu_custom_call.1} parent=11 // pred_fallthru
          _
        // Predicated region
        $region33: #{tpu_custom_call.1} parent=11 // pred_check
          %p225 = pneg %p169
        $region34: #{tpu_custom_call.1} parent=11 // pred_check_branch
          %227 = sbr.rel (%p225) target = $region36
        $region35: #{tpu_custom_call.1} parent=11 // pred_region
          _
        $region36: #{tpu_custom_call.1} parent=11 // pred_fallthru
          _
      $region12: #{tpu_custom_call.1} parent=5 // pred_fallthru
        _
      %p228 = scmp.lt.s32.totalorder %s17, 2
      // Predicated region
      $region37: #{tpu_custom_call.1} parent=5 // pred_check
        %p229 = pneg %p228
      $region38: #{tpu_custom_call.1} parent=5 // pred_check_branch
        %231 = sbr.rel (%p229) target = $region40
      $region39: #{tpu_custom_call.1} parent=5 // pred_region
        // Predicated region
        $region41: #{tpu_custom_call.1} parent=39 // pred_check
          %p232 = pneg %p37
        $region42: #{tpu_custom_call.1} parent=39 // pred_check_branch
          %234 = sbr.rel (%p232) target = $region44
        $region43: #{tpu_custom_call.1} parent=39 // pred_region
          %p235 = scmp.lt.s32.totalorder %s17, 1
          %s236 = scalar_select %p235, %s17, 1
          %s237 = smul.addr %s236, 8
          %s238 = scalar_lea.vmem %s0, %s237
        $region44: #{tpu_custom_call.1} parent=39 // pred_fallthru
          _
      $region40: #{tpu_custom_call.1} parent=5 // pred_fallthru
        _
      %p239 = scmp.le.s32.totalorder 1, %s17
      %p240 = scmp.lt.s32.totalorder %s17, 3
      %p241 = pnand %p239, %p240
      %p242 = pneg %p241
      // Predicated region
      $region45: #{tpu_custom_call.1} parent=5 // pred_check
        _
      $region46: #{tpu_custom_call.1} parent=5 // pred_check_branch
        %244 = sbr.rel (%p241) target = $region48
      $region47: #{tpu_custom_call.1} parent=5 // pred_region
        %s245 = ssub.s32 %s17, 1
        %p246 = scmp.lt.s32.totalorder %s22, 1
        %s247 = scalar_select %p246, %s22, 1
        %s248 = smul.addr %s247, 8
        %s249 = scalar_lea.vmem %s0, %s248
        %p250 = pneg %p43
        %p251 = pneg %p40
        %p252 = pneg %p64
        %p253 = pneg %p61
        %p254 = pneg %p85
        %p255 = pneg %p82
        %p256 = pneg %p106
        %p257 = pneg %p103
        %p258 = pneg %p127
        %p259 = pneg %p124
        %p260 = pneg %p148
        %p261 = pneg %p145
        %p262 = pneg %p169
        %p263 = pneg %p166
        %p264 = pneg %p195
        %p265 = pneg %p192
        %s266 = sand.u32 %s182, 1
        %s267 = scalar_lea.sflag [#allocation4], %s266
        %s268 = sand.u32 %s182, 1
        %s269 = smul.addr %s268, 8
        %s270 = scalar_lea.vmem [#allocation3], %s269
        %p271 = scmp.lt.s32.totalorder %s22, 1
        %s272 = scalar_select %p271, %s22, 1
        %s273 = smul.addr %s272, 8
        %s274 = scalar_lea.vmem %s0, %s273
        %v275 = vld [vmem:[%s274] sm:$0xff]
        %v276 = vld [vmem:[%s1] sm:$0xff]
        %v277 = vld [vmem:[%s1 + $0x8] sm:$0xff]
        %v278 = vld [vmem:[%s1 + $0x10] sm:$0xff]
        %v279 = vld [vmem:[%s1 + $0x18] sm:$0xff]
        %v280 = vld [vmem:[%s2] sm:$0x1]
        %v282 = vlaneseq
        %v283 = vshrl.u32 %v282, 7
        %v284 = vsub.s32 0, %v283
        %v285 = vrot.slane %v280, %v284
        %vm287 = vcmask 261120
        %v289 = vsel %vm287, %v275, 0
        %291 = vmatprep.subr.mxu0 0.0
        %v292 = vand.u32 %v276, 4294901760
        %293 = vmatpush1.msra.mxu0 %v292
        %294 = vmatprep.subr.mxu0 0.0
        %v295 = vand.u32 %v277, 4294901760
        %296 = vmatpush1.msra.mxu0 %v295
        %297 = vmatprep.subr.mxu0 0.0
        %v298 = vand.u32 %v278, 4294901760
        %299 = vmatpush1.msra.mxu0 %v298
        %300 = vmatprep.subr.mxu0 0.0
        %v301 = vand.u32 %v279, 4294901760
        %302 = vmatpush1.msra.mxu0 %v301
        %303 = vmatprep.subr.mxu0 0.0
        %304 = vmatpush1.msra.mxu0 0.0
        %305 = vmatprep.subr.mxu0 0.0
        %306 = vmatpush1.msra.mxu0 0.0
        %307 = vmatprep.subr.mxu0 0.0
        %308 = vmatpush1.msra.mxu0 0.0
        %309 = vmatprep.subr.mxu0 0.0
        %310 = vmatpush1.msra.mxu0 0.0
        %311 = vmatprep.subr.mxu0 0.0
        %312 = vmatpush1.msra.mxu0 0.0
        %313 = vmatprep.subr.mxu0 0.0
        %314 = vmatpush1.msra.mxu0 0.0
        %315 = vmatprep.subr.mxu0 0.0
        %316 = vmatpush1.msra.mxu0 0.0
        %317 = vmatprep.subr.mxu0 0.0
        %318 = vmatpush1.msra.mxu0 0.0
        %319 = vmatprep.subr.mxu0 0.0
        %320 = vmatpush1.msra.mxu0 0.0
        %321 = vmatprep.subr.mxu0 0.0
        %322 = vmatpush1.msra.mxu0 0.0
        %323 = vmatprep.subr.mxu0 0.0
        %324 = vmatpush1.msra.mxu0 0.0
        %325 = vmatprep.subr.mxu0 0.0
        %326 = vmatpush1.msra.mxu0 0.0
        %327 = vmatprep.subr.mxu0 0.0
        %328 = vmatpush1.msra.mxu0 0.0
        %329 = vmatprep.subr.mxu0 0.0
        %330 = vmatpush1.msra.mxu0 0.0
        %331 = vmatprep.subr.mxu0 0.0
        %332 = vmatpush1.msra.mxu0 0.0
        %333 = vmatprep.subr.mxu0 0.0
        %334 = vmatpush1.msra.mxu0 0.0
        %335 = vmatprep.subr.mxu0 0.0
        %336 = vmatpush1.msra.mxu0 0.0
        %337 = vmatprep.subr.mxu0 0.0
        %338 = vmatpush1.msra.mxu0 0.0
        %339 = vmatprep.subr.mxu0 0.0
        %340 = vmatpush1.msra.mxu0 0.0
        %341 = vmatprep.subr.mxu0 0.0
        %342 = vmatpush1.msra.mxu0 0.0
        %343 = vmatprep.subr.mxu0 0.0
        %344 = vmatpush1.msra.mxu0 0.0
        %345 = vmatprep.subr.mxu0 0.0
        %346 = vmatpush1.msra.mxu0 0.0
        %347 = vmatprep.subr.mxu0 0.0
        %348 = vmatpush1.msra.mxu0 0.0
        %349 = vmatprep.subr.mxu0 0.0
        %350 = vmatpush1.msra.mxu0 0.0
        %351 = vmatprep.subr.mxu0 0.0
        %352 = vmatpush1.msra.mxu0 0.0
        %353 = vmatprep.subr.mxu0 0.0
        %354 = vmatpush1.msra.mxu0 0.0
        %355 = vmatprep.subr.mxu0 0.0
        %356 = vmatpush1.msra.mxu0 0.0
        %357 = vmatprep.subr.mxu0 0.0
        %358 = vmatpush1.msra.mxu0 0.0
        %359 = vmatprep.mubr.f32.mxu0 0.0
        %v360 = vand.u32 %v289, 4294901760
        %v361 = vsub.f32 %v289, %v360
        %v362 = vand.u32 %v361, 4294901760
        %v363 = vsub.f32 %v361, %v362
        %v364 = vand.u32 %v363, 4294901760
        %365 = vmatmul.mubr.f32.gmra.mrb[0].mxu0 %v364
        %v366 = vpop.f32.mrb[0].mxu0
        %v367 = vadd.f32 %v285, %v366
        %v368 = vpop.f32.mrb[0].mxu0
        %369 = vdwg.mxu0
        %370 = vmatprep.subr.mxu0 0.0
        %v371 = vand.u32 %v276, 4294901760
        %v372 = vsub.f32 %v276, %v371
        %v373 = vand.u32 %v372, 4294901760
        %v374 = vsub.f32 %v372, %v373
        %v375 = vand.u32 %v374, 4294901760
        %376 = vmatpush1.msra.mxu0 %v375
        %377 = vmatprep.subr.mxu0 0.0
        %v378 = vand.u32 %v277, 4294901760
        %v379 = vsub.f32 %v277, %v378
        %v380 = vand.u32 %v379, 4294901760
        %v381 = vsub.f32 %v379, %v380
        %v382 = vand.u32 %v381, 4294901760
        %383 = vmatpush1.msra.mxu0 %v382
        %384 = vmatprep.subr.mxu0 0.0
        %v385 = vand.u32 %v278, 4294901760
        %v386 = vsub.f32 %v278, %v385
        %v387 = vand.u32 %v386, 4294901760
        %v388 = vsub.f32 %v386, %v387
        %v389 = vand.u32 %v388, 4294901760
        %390 = vmatpush1.msra.mxu0 %v389
        %391 = vmatprep.subr.mxu0 0.0
        %v392 = vand.u32 %v279, 4294901760
        %v393 = vsub.f32 %v279, %v392
        %v394 = vand.u32 %v393, 4294901760
        %v395 = vsub.f32 %v393, %v394
        %v396 = vand.u32 %v395, 4294901760
        %397 = vmatpush1.msra.mxu0 %v396
        %398 = vmatprep.subr.mxu0 0.0
        %399 = vmatpush1.msra.mxu0 0.0
        %400 = vmatprep.subr.mxu0 0.0
        %401 = vmatpush1.msra.mxu0 0.0
        %402 = vmatprep.subr.mxu0 0.0
        %403 = vmatpush1.msra.mxu0 0.0
        %404 = vmatprep.subr.mxu0 0.0
        %405 = vmatpush1.msra.mxu0 0.0
        %406 = vmatprep.subr.mxu0 0.0
        %407 = vmatpush1.msra.mxu0 0.0
        %408 = vmatprep.subr.mxu0 0.0
        %409 = vmatpush1.msra.mxu0 0.0
        %410 = vmatprep.subr.mxu0 0.0
        %411 = vmatpush1.msra.mxu0 0.0
        %412 = vmatprep.subr.mxu0 0.0
        %413 = vmatpush1.msra.mxu0 0.0
        %414 = vmatprep.subr.mxu0 0.0
        %415 = vmatpush1.msra.mxu0 0.0
        %416 = vmatprep.subr.mxu0 0.0
        %417 = vmatpush1.msra.mxu0 0.0
        %418 = vmatprep.subr.mxu0 0.0
        %419 = vmatpush1.msra.mxu0 0.0
        %420 = vmatprep.subr.mxu0 0.0
        %421 = vmatpush1.msra.mxu0 0.0
        %422 = vmatprep.subr.mxu0 0.0
        %423 = vmatpush1.msra.mxu0 0.0
        %424 = vmatprep.subr.mxu0 0.0
        %425 = vmatpush1.msra.mxu0 0.0
        %426 = vmatprep.subr.mxu0 0.0
        %427 = vmatpush1.msra.mxu0 0.0
        %428 = vmatprep.subr.mxu0 0.0
        %429 = vmatpush1.msra.mxu0 0.0
        %430 = vmatprep.subr.mxu0 0.0
        %431 = vmatpush1.msra.mxu0 0.0
        %432 = vmatprep.subr.mxu0 0.0
        %433 = vmatpush1.msra.mxu0 0.0
        %434 = vmatprep.subr.mxu0 0.0
        %435 = vmatpush1.msra.mxu0 0.0
        %436 = vmatprep.subr.mxu0 0.0
        %437 = vmatpush1.msra.mxu0 0.0
        %438 = vmatprep.subr.mxu0 0.0
        %439 = vmatpush1.msra.mxu0 0.0
        %440 = vmatprep.subr.mxu0 0.0
        %441 = vmatpush1.msra.mxu0 0.0
        %442 = vmatprep.subr.mxu0 0.0
        %443 = vmatpush1.msra.mxu0 0.0
        %444 = vmatprep.subr.mxu0 0.0
        %445 = vmatpush1.msra.mxu0 0.0
        %446 = vmatprep.subr.mxu0 0.0
        %447 = vmatpush1.msra.mxu0 0.0
        %448 = vmatprep.subr.mxu0 0.0
        %449 = vmatpush1.msra.mxu0 0.0
        %450 = vmatprep.subr.mxu0 0.0
        %451 = vmatpush1.msra.mxu0 0.0
        %452 = vmatprep.subr.mxu0 0.0
        %453 = vmatpush1.msra.mxu0 0.0
        %454 = vmatprep.mubr.f32.mxu0 0.0
        %v455 = vand.u32 %v289, 4294901760
        %456 = vmatmul.mubr.f32.gmra.mrb[0].mxu0 %v455
        %v457 = vpop.f32.mrb[0].mxu0
        %v458 = vadd.f32 %v367, %v457
        %v459 = vpop.f32.mrb[0].mxu0
        %460 = vdwg.mxu0
        %461 = vmatprep.subr.mxu0 0.0
        %v462 = vand.u32 %v276, 4294901760
        %v463 = vsub.f32 %v276, %v462
        %464 = vmatpush1.msra.mxu0 %v463
        %465 = vmatprep.subr.mxu0 0.0
        %v466 = vand.u32 %v277, 4294901760
        %v467 = vsub.f32 %v277, %v466
        %468 = vmatpush1.msra.mxu0 %v467
        %469 = vmatprep.subr.mxu0 0.0
        %v470 = vand.u32 %v278, 4294901760
        %v471 = vsub.f32 %v278, %v470
        %472 = vmatpush1.msra.mxu0 %v471
        %473 = vmatprep.subr.mxu0 0.0
        %v474 = vand.u32 %v279, 4294901760
        %v475 = vsub.f32 %v279, %v474
        %476 = vmatpush1.msra.mxu0 %v475
        %477 = vmatprep.subr.mxu0 0.0
        %478 = vmatpush1.msra.mxu0 0.0
        %479 = vmatprep.subr.mxu0 0.0
        %480 = vmatpush1.msra.mxu0 0.0
        %481 = vmatprep.subr.mxu0 0.0
        %482 = vmatpush1.msra.mxu0 0.0
        %483 = vmatprep.subr.mxu0 0.0
        %484 = vmatpush1.msra.mxu0 0.0
        %485 = vmatprep.subr.mxu0 0.0
        %486 = vmatpush1.msra.mxu0 0.0
        %487 = vmatprep.subr.mxu0 0.0
        %488 = vmatpush1.msra.mxu0 0.0
        %489 = vmatprep.subr.mxu0 0.0
        %490 = vmatpush1.msra.mxu0 0.0
        %491 = vmatprep.subr.mxu0 0.0
        %492 = vmatpush1.msra.mxu0 0.0
        %493 = vmatprep.subr.mxu0 0.0
        %494 = vmatpush1.msra.mxu0 0.0
        %495 = vmatprep.subr.mxu0 0.0
        %496 = vmatpush1.msra.mxu0 0.0
        %497 = vmatprep.subr.mxu0 0.0
        %498 = vmatpush1.msra.mxu0 0.0
        %499 = vmatprep.subr.mxu0 0.0
        %500 = vmatpush1.msra.mxu0 0.0
        %501 = vmatprep.subr.mxu0 0.0
        %502 = vmatpush1.msra.mxu0 0.0
        %503 = vmatprep.subr.mxu0 0.0
        %504 = vmatpush1.msra.mxu0 0.0
        %505 = vmatprep.subr.mxu0 0.0
        %506 = vmatpush1.msra.mxu0 0.0
        %507 = vmatprep.subr.mxu0 0.0
        %508 = vmatpush1.msra.mxu0 0.0
        %509 = vmatprep.subr.mxu0 0.0
        %510 = vmatpush1.msra.mxu0 0.0
        %511 = vmatprep.subr.mxu0 0.0
        %512 = vmatpush1.msra.mxu0 0.0
        %513 = vmatprep.subr.mxu0 0.0
        %514 = vmatpush1.msra.mxu0 0.0
        %515 = vmatprep.subr.mxu0 0.0
        %516 = vmatpush1.msra.mxu0 0.0
        %517 = vmatprep.subr.mxu0 0.0
        %518 = vmatpush1.msra.mxu0 0.0
        %519 = vmatprep.subr.mxu0 0.0
        %520 = vmatpush1.msra.mxu0 0.0
        %521 = vmatprep.subr.mxu0 0.0
        %522 = vmatpush1.msra.mxu0 0.0
        %523 = vmatprep.subr.mxu0 0.0
        %524 = vmatpush1.msra.mxu0 0.0
        %525 = vmatprep.subr.mxu0 0.0
        %526 = vmatpush1.msra.mxu0 0.0
        %527 = vmatprep.subr.mxu0 0.0
        %528 = vmatpush1.msra.mxu0 0.0
        %529 = vmatprep.subr.mxu0 0.0
        %530 = vmatpush1.msra.mxu0 0.0
        %531 = vmatprep.subr.mxu0 0.0
        %532 = vmatpush1.msra.mxu0 0.0
        %533 = vmatprep.mubr.f32.mxu0 0.0
        %v534 = vand.u32 %v289, 4294901760
        %v535 = vsub.f32 %v289, %v534
        %536 = vmatmul.mubr.f32.gmra.mrb[0].mxu0 %v535
        %v537 = vpop.f32.mrb[0].mxu0
        %v538 = vadd.f32 %v458, %v537
        %v539 = vpop.f32.mrb[0].mxu0
        %540 = vdwg.mxu0
        %541 = vmatprep.subr.mxu0 0.0
        %v542 = vand.u32 %v276, 4294901760
        %543 = vmatpush1.msra.mxu0 %v542
        %544 = vmatprep.subr.mxu0 0.0
        %v545 = vand.u32 %v277, 4294901760
        %546 = vmatpush1.msra.mxu0 %v545
        %547 = vmatprep.subr.mxu0 0.0
        %v548 = vand.u32 %v278, 4294901760
        %549 = vmatpush1.msra.mxu0 %v548
        %550 = vmatprep.subr.mxu0 0.0
        %v551 = vand.u32 %v279, 4294901760
        %552 = vmatpush1.msra.mxu0 %v551
        %553 = vmatprep.subr.mxu0 0.0
        %554 = vmatpush1.msra.mxu0 0.0
        %555 = vmatprep.subr.mxu0 0.0
        %556 = vmatpush1.msra.mxu0 0.0
        %557 = vmatprep.subr.mxu0 0.0
        %558 = vmatpush1.msra.mxu0 0.0
        %559 = vmatprep.subr.mxu0 0.0
        %560 = vmatpush1.msra.mxu0 0.0
        %561 = vmatprep.subr.mxu0 0.0
        %562 = vmatpush1.msra.mxu0 0.0
        %563 = vmatprep.subr.mxu0 0.0
        %564 = vmatpush1.msra.mxu0 0.0
        %565 = vmatprep.subr.mxu0 0.0
        %566 = vmatpush1.msra.mxu0 0.0
        %567 = vmatprep.subr.mxu0 0.0
        %568 = vmatpush1.msra.mxu0 0.0
        %569 = vmatprep.subr.mxu0 0.0
        %570 = vmatpush1.msra.mxu0 0.0
        %571 = vmatprep.subr.mxu0 0.0
        %572 = vmatpush1.msra.mxu0 0.0
        %573 = vmatprep.subr.mxu0 0.0
        %574 = vmatpush1.msra.mxu0 0.0
        %575 = vmatprep.subr.mxu0 0.0
        %576 = vmatpush1.msra.mxu0 0.0
        %577 = vmatprep.subr.mxu0 0.0
        %578 = vmatpush1.msra.mxu0 0.0
        %579 = vmatprep.subr.mxu0 0.0
        %580 = vmatpush1.msra.mxu0 0.0
        %581 = vmatprep.subr.mxu0 0.0
        %582 = vmatpush1.msra.mxu0 0.0
        %583 = vmatprep.subr.mxu0 0.0
        %584 = vmatpush1.msra.mxu0 0.0
        %585 = vmatprep.subr.mxu0 0.0
        %586 = vmatpush1.msra.mxu0 0.0
        %587 = vmatprep.subr.mxu0 0.0
        %588 = vmatpush1.msra.mxu0 0.0
        %589 = vmatprep.subr.mxu0 0.0
        %590 = vmatpush1.msra.mxu0 0.0
        %591 = vmatprep.subr.mxu0 0.0
        %592 = vmatpush1.msra.mxu0 0.0
        %593 = vmatprep.subr.mxu0 0.0
        %594 = vmatpush1.msra.mxu0 0.0
        %595 = vmatprep.subr.mxu0 0.0
        %596 = vmatpush1.msra.mxu0 0.0
        %597 = vmatprep.subr.mxu0 0.0
        %598 = vmatpush1.msra.mxu0 0.0
        %599 = vmatprep.subr.mxu0 0.0
        %600 = vmatpush1.msra.mxu0 0.0
        %601 = vmatprep.subr.mxu0 0.0
        %602 = vmatpush1.msra.mxu0 0.0
        %603 = vmatprep.subr.mxu0 0.0
        %604 = vmatpush1.msra.mxu0 0.0
        %605 = vmatprep.subr.mxu0 0.0
        %606 = vmatpush1.msra.mxu0 0.0
        %607 = vmatprep.subr.mxu0 0.0
        %608 = vmatpush1.msra.mxu0 0.0
        %609 = vmatprep.mubr.f32.mxu0 0.0
        %v610 = vand.u32 %v289, 4294901760
        %v611 = vsub.f32 %v289, %v610
        %v612 = vand.u32 %v611, 4294901760
        %613 = vmatmul.mubr.f32.gmra.mrb[0].mxu0 %v612
        %v614 = vpop.f32.mrb[0].mxu0
        %v615 = vadd.f32 %v538, %v614
        %v616 = vpop.f32.mrb[0].mxu0
        %617 = vdwg.mxu0
        %618 = vmatprep.subr.mxu0 0.0
        %v619 = vand.u32 %v276, 4294901760
        %v620 = vsub.f32 %v276, %v619
        %v621 = vand.u32 %v620, 4294901760
        %622 = vmatpush1.msra.mxu0 %v621
        %623 = vmatprep.subr.mxu0 0.0
        %v624 = vand.u32 %v277, 4294901760
        %v625 = vsub.f32 %v277, %v624
        %v626 = vand.u32 %v625, 4294901760
        %627 = vmatpush1.msra.mxu0 %v626
        %628 = vmatprep.subr.mxu0 0.0
        %v629 = vand.u32 %v278, 4294901760
        %v630 = vsub.f32 %v278, %v629
        %v631 = vand.u32 %v630, 4294901760
        %632 = vmatpush1.msra.mxu0 %v631
        %633 = vmatprep.subr.mxu0 0.0
        %v634 = vand.u32 %v279, 4294901760
        %v635 = vsub.f32 %v279, %v634
        %v636 = vand.u32 %v635, 4294901760
        %637 = vmatpush1.msra.mxu0 %v636
        %638 = vmatprep.subr.mxu0 0.0
        %639 = vmatpush1.msra.mxu0 0.0
        %640 = vmatprep.subr.mxu0 0.0
        %641 = vmatpush1.msra.mxu0 0.0
        %642 = vmatprep.subr.mxu0 0.0
        %643 = vmatpush1.msra.mxu0 0.0
        %644 = vmatprep.subr.mxu0 0.0
        %645 = vmatpush1.msra.mxu0 0.0
        %646 = vmatprep.subr.mxu0 0.0
        %647 = vmatpush1.msra.mxu0 0.0
        %648 = vmatprep.subr.mxu0 0.0
        %649 = vmatpush1.msra.mxu0 0.0
        %650 = vmatprep.subr.mxu0 0.0
        %651 = vmatpush1.msra.mxu0 0.0
        %652 = vmatprep.subr.mxu0 0.0
        %653 = vmatpush1.msra.mxu0 0.0
        %654 = vmatprep.subr.mxu0 0.0
        %655 = vmatpush1.msra.mxu0 0.0
        %656 = vmatprep.subr.mxu0 0.0
        %657 = vmatpush1.msra.mxu0 0.0
        %658 = vmatprep.subr.mxu0 0.0
        %659 = vmatpush1.msra.mxu0 0.0
        %660 = vmatprep.subr.mxu0 0.0
        %661 = vmatpush1.msra.mxu0 0.0
        %662 = vmatprep.subr.mxu0 0.0
        %663 = vmatpush1.msra.mxu0 0.0
        %664 = vmatprep.subr.mxu0 0.0
        %665 = vmatpush1.msra.mxu0 0.0
        %666 = vmatprep.subr.mxu0 0.0
        %667 = vmatpush1.msra.mxu0 0.0
        %668 = vmatprep.subr.mxu0 0.0
        %669 = vmatpush1.msra.mxu0 0.0
        %670 = vmatprep.subr.mxu0 0.0
        %671 = vmatpush1.msra.mxu0 0.0
        %672 = vmatprep.subr.mxu0 0.0
        %673 = vmatpush1.msra.mxu0 0.0
        %674 = vmatprep.subr.mxu0 0.0
        %675 = vmatpush1.msra.mxu0 0.0
        %676 = vmatprep.subr.mxu0 0.0
        %677 = vmatpush1.msra.mxu0 0.0
        %678 = vmatprep.subr.mxu0 0.0
        %679 = vmatpush1.msra.mxu0 0.0
        %680 = vmatprep.subr.mxu0 0.0
        %681 = vmatpush1.msra.mxu0 0.0
        %682 = vmatprep.subr.mxu0 0.0
        %683 = vmatpush1.msra.mxu0 0.0
        %684 = vmatprep.subr.mxu0 0.0
        %685 = vmatpush1.msra.mxu0 0.0
        %686 = vmatprep.subr.mxu0 0.0
        %687 = vmatpush1.msra.mxu0 0.0
        %688 = vmatprep.subr.mxu0 0.0
        %689 = vmatpush1.msra.mxu0 0.0
        %690 = vmatprep.subr.mxu0 0.0
        %691 = vmatpush1.msra.mxu0 0.0
        %692 = vmatprep.subr.mxu0 0.0
        %693 = vmatpush1.msra.mxu0 0.0
        %694 = vmatprep.mubr.f32.mxu0 0.0
        %v695 = vand.u32 %v289, 4294901760
        %696 = vmatmul.mubr.f32.gmra.mrb[0].mxu0 %v695
        %v697 = vpop.f32.mrb[0].mxu0
        %v698 = vadd.f32 %v615, %v697
        %v699 = vpop.f32.mrb[0].mxu0
        %700 = vdwg.mxu0
        %701 = vmatprep.subr.mxu0 0.0
        %v702 = vand.u32 %v276, 4294901760
        %703 = vmatpush1.msra.mxu0 %v702
        %704 = vmatprep.subr.mxu0 0.0
        %v705 = vand.u32 %v277, 4294901760
        %706 = vmatpush1.msra.mxu0 %v705
        %707 = vmatprep.subr.mxu0 0.0
        %v708 = vand.u32 %v278, 4294901760
        %709 = vmatpush1.msra.mxu0 %v708
        %710 = vmatprep.subr.mxu0 0.0
        %v711 = vand.u32 %v279, 4294901760
        %712 = vmatpush1.msra.mxu0 %v711
        %713 = vmatprep.subr.mxu0 0.0
        %714 = vmatpush1.msra.mxu0 0.0
        %715 = vmatprep.subr.mxu0 0.0
        %716 = vmatpush1.msra.mxu0 0.0
        %717 = vmatprep.subr.mxu0 0.0
        %718 = vmatpush1.msra.mxu0 0.0
        %719 = vmatprep.subr.mxu0 0.0
        %720 = vmatpush1.msra.mxu0 0.0
        %721 = vmatprep.subr.mxu0 0.0
        %722 = vmatpush1.msra.mxu0 0.0
        %723 = vmatprep.subr.mxu0 0.0
        %724 = vmatpush1.msra.mxu0 0.0
        %725 = vmatprep.subr.mxu0 0.0
        %726 = vmatpush1.msra.mxu0 0.0
        %727 = vmatprep.subr.mxu0 0.0
        %728 = vmatpush1.msra.mxu0 0.0
        %729 = vmatprep.subr.mxu0 0.0
        %730 = vmatpush1.msra.mxu0 0.0
        %731 = vmatprep.subr.mxu0 0.0
        %732 = vmatpush1.msra.mxu0 0.0
        %733 = vmatprep.subr.mxu0 0.0
        %734 = vmatpush1.msra.mxu0 0.0
        %735 = vmatprep.subr.mxu0 0.0
        %736 = vmatpush1.msra.mxu0 0.0
        %737 = vmatprep.subr.mxu0 0.0
        %738 = vmatpush1.msra.mxu0 0.0
        %739 = vmatprep.subr.mxu0 0.0
        %740 = vmatpush1.msra.mxu0 0.0
        %741 = vmatprep.subr.mxu0 0.0
        %742 = vmatpush1.msra.mxu0 0.0
        %743 = vmatprep.subr.mxu0 0.0
        %744 = vmatpush1.msra.mxu0 0.0
        %745 = vmatprep.subr.mxu0 0.0
        %746 = vmatpush1.msra.mxu0 0.0
        %747 = vmatprep.subr.mxu0 0.0
        %748 = vmatpush1.msra.mxu0 0.0
        %749 = vmatprep.subr.mxu0 0.0
        %750 = vmatpush1.msra.mxu0 0.0
        %751 = vmatprep.subr.mxu0 0.0
        %752 = vmatpush1.msra.mxu0 0.0
        %753 = vmatprep.subr.mxu0 0.0
        %754 = vmatpush1.msra.mxu0 0.0
        %755 = vmatprep.subr.mxu0 0.0
        %756 = vmatpush1.msra.mxu0 0.0
        %757 = vmatprep.subr.mxu0 0.0
        %758 = vmatpush1.msra.mxu0 0.0
        %759 = vmatprep.subr.mxu0 0.0
        %760 = vmatpush1.msra.mxu0 0.0
        %761 = vmatprep.subr.mxu0 0.0
        %762 = vmatpush1.msra.mxu0 0.0
        %763 = vmatprep.subr.mxu0 0.0
        %764 = vmatpush1.msra.mxu0 0.0
        %765 = vmatprep.subr.mxu0 0.0
        %766 = vmatpush1.msra.mxu0 0.0
        %767 = vmatprep.subr.mxu0 0.0
        %768 = vmatpush1.msra.mxu0 0.0
        %769 = vmatprep.mubr.f32.mxu0 0.0
        %v770 = vand.u32 %v289, 4294901760
        %771 = vmatmul.mubr.f32.gmra.mrb[0].mxu0 %v770
        %v772 = vpop.f32.mrb[0].mxu0
        %v773 = vadd.f32 %v698, %v772
        %v774 = vpop.f32.mrb[0].mxu0
        %775 = vdwg.mxu0
        %v776 = vmax.f32 %v773, 0.0
        %v777 = vld [vmem:[%s3] sm:$0xff]
        %v778 = vld [vmem:[%s3 + $0x8] sm:$0xff]
        %v779 = vld [vmem:[%s3 + $0x10] sm:$0xff]
        %v780 = vld [vmem:[%s3 + $0x18] sm:$0xff]
        %v781 = vld [vmem:[%s3 + $0x20] sm:$0xff]
        %v782 = vld [vmem:[%s3 + $0x28] sm:$0xff]
        %v783 = vld [vmem:[%s3 + $0x30] sm:$0xff]
        %v784 = vld [vmem:[%s3 + $0x38] sm:$0xff]
        %v785 = vld [vmem:[%s4] sm:$0x1]
        %v787 = vlaneseq
        %v788 = vshrl.u32 %v787, 7
        %v789 = vsub.s32 0, %v788
        %v790 = vrot.slane %v785, %v789
        %vm792 = vcmask 523264
        %v794 = vsel %vm792, %v776, 0
        %796 = vmatprep.subr.mxu0 0.0
        %v797 = vand.u32 %v777, 4294901760
        %798 = vmatpush1.msra.mxu0 %v797
        %799 = vmatprep.subr.mxu0 0.0
        %v800 = vand.u32 %v778, 4294901760
        %801 = vmatpush1.msra.mxu0 %v800
        %802 = vmatprep.subr.mxu0 0.0
        %v803 = vand.u32 %v779, 4294901760
        %804 = vmatpush1.msra.mxu0 %v803
        %805 = vmatprep.subr.mxu0 0.0
        %v806 = vand.u32 %v780, 4294901760
        %807 = vmatpush1.msra.mxu0 %v806
        %808 = vmatprep.subr.mxu0 0.0
        %v809 = vand.u32 %v781, 4294901760
        %810 = vmatpush1.msra.mxu0 %v809
        %811 = vmatprep.subr.mxu0 0.0
        %v812 = vand.u32 %v782, 4294901760
        %813 = vmatpush1.msra.mxu0 %v812
        %814 = vmatprep.subr.mxu0 0.0
        %v815 = vand.u32 %v783, 4294901760
        %816 = vmatpush1.msra.mxu0 %v815
        %817 = vmatprep.subr.mxu0 0.0
        %v818 = vand.u32 %v784, 4294901760
        %819 = vmatpush1.msra.mxu0 %v818
        %820 = vmatprep.subr.mxu0 0.0
        %821 = vmatpush1.msra.mxu0 0.0
        %822 = vmatprep.subr.mxu0 0.0
        %823 = vmatpush1.msra.mxu0 0.0
        %824 = vmatprep.subr.mxu0 0.0
        %825 = vmatpush1.msra.mxu0 0.0
        %826 = vmatprep.subr.mxu0 0.0
        %827 = vmatpush1.msra.mxu0 0.0
        %828 = vmatprep.subr.mxu0 0.0
        %829 = vmatpush1.msra.mxu0 0.0
        %830 = vmatprep.subr.mxu0 0.0
        %831 = vmatpush1.msra.mxu0 0.0
        %832 = vmatprep.subr.mxu0 0.0
        %833 = vmatpush1.msra.mxu0 0.0
        %834 = vmatprep.subr.mxu0 0.0
        %835 = vmatpush1.msra.mxu0 0.0
        %836 = vmatprep.subr.mxu0 0.0
        %837 = vmatpush1.msra.mxu0 0.0
        %838 = vmatprep.subr.mxu0 0.0
        %839 = vmatpush1.msra.mxu0 0.0
        %840 = vmatprep.subr.mxu0 0.0
        %841 = vmatpush1.msra.mxu0 0.0
        %842 = vmatprep.subr.mxu0 0.0
        %843 = vmatpush1.msra.mxu0 0.0
        %844 = vmatprep.subr.mxu0 0.0
        %845 = vmatpush1.msra.mxu0 0.0
        %846 = vmatprep.subr.mxu0 0.0
        %847 = vmatpush1.msra.mxu0 0.0
        %848 = vmatprep.subr.mxu0 0.0
        %849 = vmatpush1.msra.mxu0 0.0
        %850 = vmatprep.subr.mxu0 0.0
        %851 = vmatpush1.msra.mxu0 0.0
        %852 = vmatprep.subr.mxu0 0.0
        %853 = vmatpush1.msra.mxu0 0.0
        %854 = vmatprep.subr.mxu0 0.0
        %855 = vmatpush1.msra.mxu0 0.0
        %856 = vmatprep.subr.mxu0 0.0
        %857 = vmatpush1.msra.mxu0 0.0
        %858 = vmatprep.subr.mxu0 0.0
        %859 = vmatpush1.msra.mxu0 0.0
        %860 = vmatprep.subr.mxu0 0.0
        %861 = vmatpush1.msra.mxu0 0.0
        %862 = vmatprep.subr.mxu0 0.0
        %863 = vmatpush1.msra.mxu0 0.0
        %864 = vmatprep.subr.mxu0 0.0
        %865 = vmatpush1.msra.mxu0 0.0
        %866 = vmatprep.subr.mxu0 0.0
        %867 = vmatpush1.msra.mxu0 0.0
        %868 = vmatprep.mubr.f32.mxu0 0.0
        %v869 = vand.u32 %v794, 4294901760
        %v870 = vsub.f32 %v794, %v869
        %v871 = vand.u32 %v870, 4294901760
        %v872 = vsub.f32 %v870, %v871
        %v873 = vand.u32 %v872, 4294901760
        %874 = vmatmul.mubr.f32.gmra.mrb[0].mxu0 %v873
        %v875 = vpop.f32.mrb[0].mxu0
        %v876 = vadd.f32 %v790, %v875
        %v877 = vpop.f32.mrb[0].mxu0
        %878 = vdwg.mxu0
        %879 = vmatprep.subr.mxu0 0.0
        %v880 = vand.u32 %v777, 4294901760
        %v881 = vsub.f32 %v777, %v880
        %v882 = vand.u32 %v881, 4294901760
        %v883 = vsub.f32 %v881, %v882
        %v884 = vand.u32 %v883, 4294901760
        %885 = vmatpush1.msra.mxu0 %v884
        %886 = vmatprep.subr.mxu0 0.0
        %v887 = vand.u32 %v778, 4294901760
        %v888 = vsub.f32 %v778, %v887
        %v889 = vand.u32 %v888, 4294901760
        %v890 = vsub.f32 %v888, %v889
        %v891 = vand.u32 %v890, 4294901760
        %892 = vmatpush1.msra.mxu0 %v891
        %893 = vmatprep.subr.mxu0 0.0
        %v894 = vand.u32 %v779, 4294901760
        %v895 = vsub.f32 %v779, %v894
        %v896 = vand.u32 %v895, 4294901760
        %v897 = vsub.f32 %v895, %v896
        %v898 = vand.u32 %v897, 4294901760
        %899 = vmatpush1.msra.mxu0 %v898
        %900 = vmatprep.subr.mxu0 0.0
        %v901 = vand.u32 %v780, 4294901760
        %v902 = vsub.f32 %v780, %v901
        %v903 = vand.u32 %v902, 4294901760
        %v904 = vsub.f32 %v902, %v903
        %v905 = vand.u32 %v904, 4294901760
        %906 = vmatpush1.msra.mxu0 %v905
        %907 = vmatprep.subr.mxu0 0.0
        %v908 = vand.u32 %v781, 4294901760
        %v909 = vsub.f32 %v781, %v908
        %v910 = vand.u32 %v909, 4294901760
        %v911 = vsub.f32 %v909, %v910
        %v912 = vand.u32 %v911, 4294901760
        %913 = vmatpush1.msra.mxu0 %v912
        %914 = vmatprep.subr.mxu0 0.0
        %v915 = vand.u32 %v782, 4294901760
        %v916 = vsub.f32 %v782, %v915
        %v917 = vand.u32 %v916, 4294901760
        %v918 = vsub.f32 %v916, %v917
        %v919 = vand.u32 %v918, 4294901760
        %920 = vmatpush1.msra.mxu0 %v919
        %921 = vmatprep.subr.mxu0 0.0
        %v922 = vand.u32 %v783, 4294901760
        %v923 = vsub.f32 %v783, %v922
        %v924 = vand.u32 %v923, 4294901760
        %v925 = vsub.f32 %v923, %v924
        %v926 = vand.u32 %v925, 4294901760
        %927 = vmatpush1.msra.mxu0 %v926
        %928 = vmatprep.subr.mxu0 0.0
        %v929 = vand.u32 %v784, 4294901760
        %v930 = vsub.f32 %v784, %v929
        %v931 = vand.u32 %v930, 4294901760
        %v932 = vsub.f32 %v930, %v931
        %v933 = vand.u32 %v932, 4294901760
        %934 = vmatpush1.msra.mxu0 %v933
        %935 = vmatprep.subr.mxu0 0.0
        %936 = vmatpush1.msra.mxu0 0.0
        %937 = vmatprep.subr.mxu0 0.0
        %938 = vmatpush1.msra.mxu0 0.0
        %939 = vmatprep.subr.mxu0 0.0
        %940 = vmatpush1.msra.mxu0 0.0
        %941 = vmatprep.subr.mxu0 0.0
        %942 = vmatpush1.msra.mxu0 0.0
        %943 = vmatprep.subr.mxu0 0.0
        %944 = vmatpush1.msra.mxu0 0.0
        %945 = vmatprep.subr.mxu0 0.0
        %946 = vmatpush1.msra.mxu0 0.0
        %947 = vmatprep.subr.mxu0 0.0
        %948 = vmatpush1.msra.mxu0 0.0
        %949 = vmatprep.subr.mxu0 0.0
        %950 = vmatpush1.msra.mxu0 0.0
        %951 = vmatprep.subr.mxu0 0.0
        %952 = vmatpush1.msra.mxu0 0.0
        %953 = vmatprep.subr.mxu0 0.0
        %954 = vmatpush1.msra.mxu0 0.0
        %955 = vmatprep.subr.mxu0 0.0
        %956 = vmatpush1.msra.mxu0 0.0
        %957 = vmatprep.subr.mxu0 0.0
        %958 = vmatpush1.msra.mxu0 0.0
        %959 = vmatprep.subr.mxu0 0.0
        %960 = vmatpush1.msra.mxu0 0.0
        %961 = vmatprep.subr.mxu0 0.0
        %962 = vmatpush1.msra.mxu0 0.0
        %963 = vmatprep.subr.mxu0 0.0
        %964 = vmatpush1.msra.mxu0 0.0
        %965 = vmatprep.subr.mxu0 0.0
        %966 = vmatpush1.msra.mxu0 0.0
        %967 = vmatprep.subr.mxu0 0.0
        %968 = vmatpush1.msra.mxu0 0.0
        %969 = vmatprep.subr.mxu0 0.0
        %970 = vmatpush1.msra.mxu0 0.0
        %971 = vmatprep.subr.mxu0 0.0
        %972 = vmatpush1.msra.mxu0 0.0
        %973 = vmatprep.subr.mxu0 0.0
        %974 = vmatpush1.msra.mxu0 0.0
        %975 = vmatprep.subr.mxu0 0.0
        %976 = vmatpush1.msra.mxu0 0.0
        %977 = vmatprep.subr.mxu0 0.0
        %978 = vmatpush1.msra.mxu0 0.0
        %979 = vmatprep.subr.mxu0 0.0
        %980 = vmatpush1.msra.mxu0 0.0
        %981 = vmatprep.subr.mxu0 0.0
        %982 = vmatpush1.msra.mxu0 0.0
        %983 = vmatprep.mubr.f32.mxu0 0.0
        %v984 = vand.u32 %v794, 4294901760
        %985 = vmatmul.mubr.f32.gmra.mrb[0].mxu0 %v984
        %v986 = vpop.f32.mrb[0].mxu0
        %v987 = vadd.f32 %v876, %v986
        %v988 = vpop.f32.mrb[0].mxu0
        %989 = vdwg.mxu0
        %990 = vmatprep.subr.mxu0 0.0
        %v991 = vand.u32 %v777, 4294901760
        %v992 = vsub.f32 %v777, %v991
        %993 = vmatpush1.msra.mxu0 %v992
        %994 = vmatprep.subr.mxu0 0.0
        %v995 = vand.u32 %v778, 4294901760
        %v996 = vsub.f32 %v778, %v995
        %997 = vmatpush1.msra.mxu0 %v996
        %998 = vmatprep.subr.mxu0 0.0
        %v999 = vand.u32 %v779, 4294901760
        %v1000 = vsub.f32 %v779, %v999
        %1001 = vmatpush1.msra.mxu0 %v1000
        %1002 = vmatprep.subr.mxu0 0.0
        %v1003 = vand.u32 %v780, 4294901760
        %v1004 = vsub.f32 %v780, %v1003
        %1005 = vmatpush1.msra.mxu0 %v1004
        %1006 = vmatprep.subr.mxu0 0.0
        %v1007 = vand.u32 %v781, 4294901760
        %v1008 = vsub.f32 %v781, %v1007
        %1009 = vmatpush1.msra.mxu0 %v1008
        %1010 = vmatprep.subr.mxu0 0.0
        %v1011 = vand.u32 %v782, 4294901760
        %v1012 = vsub.f32 %v782, %v1011
        %1013 = vmatpush1.msra.mxu0 %v1012
        %1014 = vmatprep.subr.mxu0 0.0
        %v1015 = vand.u32 %v783, 4294901760
        %v1016 = vsub.f32 %v783, %v1015
        %1017 = vmatpush1.msra.mxu0 %v1016
        %1018 = vmatprep.subr.mxu0 0.0
        %v1019 = vand.u32 %v784, 4294901760
        %v1020 = vsub.f32 %v784, %v1019
        %1021 = vmatpush1.msra.mxu0 %v1020
        %1022 = vmatprep.subr.mxu0 0.0
        %1023 = vmatpush1.msra.mxu0 0.0
        %1024 = vmatprep.subr.mxu0 0.0
        %1025 = vmatpush1.msra.mxu0 0.0
        %1026 = vmatprep.subr.mxu0 0.0
        %1027 = vmatpush1.msra.mxu0 0.0
        %1028 = vmatprep.subr.mxu0 0.0
        %1029 = vmatpush1.msra.mxu0 0.0
        %1030 = vmatprep.subr.mxu0 0.0
        %1031 = vmatpush1.msra.mxu0 0.0
        %1032 = vmatprep.subr.mxu0 0.0
        %1033 = vmatpush1.msra.mxu0 0.0
        %1034 = vmatprep.subr.mxu0 0.0
        %1035 = vmatpush1.msra.mxu0 0.0
        %1036 = vmatprep.subr.mxu0 0.0
        %1037 = vmatpush1.msra.mxu0 0.0
        %1038 = vmatprep.subr.mxu0 0.0
        %1039 = vmatpush1.msra.mxu0 0.0
        %1040 = vmatprep.subr.mxu0 0.0
        %1041 = vmatpush1.msra.mxu0 0.0
        %1042 = vmatprep.subr.mxu0 0.0
        %1043 = vmatpush1.msra.mxu0 0.0
        %1044 = vmatprep.subr.mxu0 0.0
        %1045 = vmatpush1.msra.mxu0 0.0
        %1046 = vmatprep.subr.mxu0 0.0
        %1047 = vmatpush1.msra.mxu0 0.0
        %1048 = vmatprep.subr.mxu0 0.0
        %1049 = vmatpush1.msra.mxu0 0.0
        %1050 = vmatprep.subr.mxu0 0.0
        %1051 = vmatpush1.msra.mxu0 0.0
        %1052 = vmatprep.subr.mxu0 0.0
        %1053 = vmatpush1.msra.mxu0 0.0
        %1054 = vmatprep.subr.mxu0 0.0
        %1055 = vmatpush1.msra.mxu0 0.0
        %1056 = vmatprep.subr.mxu0 0.0
        %1057 = vmatpush1.msra.mxu0 0.0
        %1058 = vmatprep.subr.mxu0 0.0
        %1059 = vmatpush1.msra.mxu0 0.0
        %1060 = vmatprep.subr.mxu0 0.0
        %1061 = vmatpush1.msra.mxu0 0.0
        %1062 = vmatprep.subr.mxu0 0.0
        %1063 = vmatpush1.msra.mxu0 0.0
        %1064 = vmatprep.subr.mxu0 0.0
        %1065 = vmatpush1.msra.mxu0 0.0
        %1066 = vmatprep.subr.mxu0 0.0
        %1067 = vmatpush1.msra.mxu0 0.0
        %1068 = vmatprep.subr.mxu0 0.0
        %1069 = vmatpush1.msra.mxu0 0.0
        %1070 = vmatprep.mubr.f32.mxu0 0.0
        %v1071 = vand.u32 %v794, 4294901760
        %v1072 = vsub.f32 %v794, %v1071
        %1073 = vmatmul.mubr.f32.gmra.mrb[0].mxu0 %v1072
        %v1074 = vpop.f32.mrb[0].mxu0
        %v1075 = vadd.f32 %v987, %v1074
        %v1076 = vpop.f32.mrb[0].mxu0
        %1077 = vdwg.mxu0
        %1078 = vmatprep.subr.mxu0 0.0
        %v1079 = vand.u32 %v777, 4294901760
        %1080 = vmatpush1.msra.mxu0 %v1079
        %1081 = vmatprep.subr.mxu0 0.0
        %v1082 = vand.u32 %v778, 4294901760
        %1083 = vmatpush1.msra.mxu0 %v1082
        %1084 = vmatprep.subr.mxu0 0.0
        %v1085 = vand.u32 %v779, 4294901760
        %1086 = vmatpush1.msra.mxu0 %v1085
        %1087 = vmatprep.subr.mxu0 0.0
        %v1088 = vand.u32 %v780, 4294901760
        %1089 = vmatpush1.msra.mxu0 %v1088
        %1090 = vmatprep.subr.mxu0 0.0
        %v1091 = vand.u32 %v781, 4294901760
        %1092 = vmatpush1.msra.mxu0 %v1091
        %1093 = vmatprep.subr.mxu0 0.0
        %v1094 = vand.u32 %v782, 4294901760
        %1095 = vmatpush1.msra.mxu0 %v1094
        %1096 = vmatprep.subr.mxu0 0.0
        %v1097 = vand.u32 %v783, 4294901760
        %1098 = vmatpush1.msra.mxu0 %v1097
        %1099 = vmatprep.subr.mxu0 0.0
        %v1100 = vand.u32 %v784, 4294901760
        %1101 = vmatpush1.msra.mxu0 %v1100
        %1102 = vmatprep.subr.mxu0 0.0
        %1103 = vmatpush1.msra.mxu0 0.0
        %1104 = vmatprep.subr.mxu0 0.0
        %1105 = vmatpush1.msra.mxu0 0.0
        %1106 = vmatprep.subr.mxu0 0.0
        %1107 = vmatpush1.msra.mxu0 0.0
        %1108 = vmatprep.subr.mxu0 0.0
        %1109 = vmatpush1.msra.mxu0 0.0
        %1110 = vmatprep.subr.mxu0 0.0
        %1111 = vmatpush1.msra.mxu0 0.0
        %1112 = vmatprep.subr.mxu0 0.0
        %1113 = vmatpush1.msra.mxu0 0.0
        %1114 = vmatprep.subr.mxu0 0.0
        %1115 = vmatpush1.msra.mxu0 0.0
        %1116 = vmatprep.subr.mxu0 0.0
        %1117 = vmatpush1.msra.mxu0 0.0
        %1118 = vmatprep.subr.mxu0 0.0
        %1119 = vmatpush1.msra.mxu0 0.0
        %1120 = vmatprep.subr.mxu0 0.0
        %1121 = vmatpush1.msra.mxu0 0.0
        %1122 = vmatprep.subr.mxu0 0.0
        %1123 = vmatpush1.msra.mxu0 0.0
        %1124 = vmatprep.subr.mxu0 0.0
        %1125 = vmatpush1.msra.mxu0 0.0
        %1126 = vmatprep.subr.mxu0 0.0
        %1127 = vmatpush1.msra.mxu0 0.0
        %1128 = vmatprep.subr.mxu0 0.0
        %1129 = vmatpush1.msra.mxu0 0.0
        %1130 = vmatprep.subr.mxu0 0.0
        %1131 = vmatpush1.msra.mxu0 0.0
        %1132 = vmatprep.subr.mxu0 0.0
        %1133 = vmatpush1.msra.mxu0 0.0
        %1134 = vmatprep.subr.mxu0 0.0
        %1135 = vmatpush1.msra.mxu0 0.0
        %1136 = vmatprep.subr.mxu0 0.0
        %1137 = vmatpush1.msra.mxu0 0.0
        %1138 = vmatprep.subr.mxu0 0.0
        %1139 = vmatpush1.msra.mxu0 0.0
        %1140 = vmatprep.subr.mxu0 0.0
        %1141 = vmatpush1.msra.mxu0 0.0
        %1142 = vmatprep.subr.mxu0 0.0
        %1143 = vmatpush1.msra.mxu0 0.0
        %1144 = vmatprep.subr.mxu0 0.0
        %1145 = vmatpush1.msra.mxu0 0.0
        %1146 = vmatprep.subr.mxu0 0.0
        %1147 = vmatpush1.msra.mxu0 0.0
        %1148 = vmatprep.subr.mxu0 0.0
        %1149 = vmatpush1.msra.mxu0 0.0
        %1150 = vmatprep.mubr.f32.mxu0 0.0
        %v1151 = vand.u32 %v794, 4294901760
        %v1152 = vsub.f32 %v794, %v1151
        %v1153 = vand.u32 %v1152, 4294901760
        %1154 = vmatmul.mubr.f32.gmra.mrb[0].mxu0 %v1153
        %v1155 = vpop.f32.mrb[0].mxu0
        %v1156 = vadd.f32 %v1075, %v1155
        %v1157 = vpop.f32.mrb[0].mxu0
        %1158 = vdwg.mxu0
        %1159 = vmatprep.subr.mxu0 0.0
        %v1160 = vand.u32 %v777, 4294901760
        %v1161 = vsub.f32 %v777, %v1160
        %v1162 = vand.u32 %v1161, 4294901760
        %1163 = vmatpush1.msra.mxu0 %v1162
        %1164 = vmatprep.subr.mxu0 0.0
        %v1165 = vand.u32 %v778, 4294901760
        %v1166 = vsub.f32 %v778, %v1165
        %v1167 = vand.u32 %v1166, 4294901760
        %1168 = vmatpush1.msra.mxu0 %v1167
        %1169 = vmatprep.subr.mxu0 0.0
        %v1170 = vand.u32 %v779, 4294901760
        %v1171 = vsub.f32 %v779, %v1170
        %v1172 = vand.u32 %v1171, 4294901760
        %1173 = vmatpush1.msra.mxu0 %v1172
        %1174 = vmatprep.subr.mxu0 0.0
        %v1175 = vand.u32 %v780, 4294901760
        %v1176 = vsub.f32 %v780, %v1175
        %v1177 = vand.u32 %v1176, 4294901760
        %1178 = vmatpush1.msra.mxu0 %v1177
        %1179 = vmatprep.subr.mxu0 0.0
        %v1180 = vand.u32 %v781, 4294901760
        %v1181 = vsub.f32 %v781, %v1180
        %v1182 = vand.u32 %v1181, 4294901760
        %1183 = vmatpush1.msra.mxu0 %v1182
        %1184 = vmatprep.subr.mxu0 0.0
        %v1185 = vand.u32 %v782, 4294901760
        %v1186 = vsub.f32 %v782, %v1185
        %v1187 = vand.u32 %v1186, 4294901760
        %1188 = vmatpush1.msra.mxu0 %v1187
        %1189 = vmatprep.subr.mxu0 0.0
        %v1190 = vand.u32 %v783, 4294901760
        %v1191 = vsub.f32 %v783, %v1190
        %v1192 = vand.u32 %v1191, 4294901760
        %1193 = vmatpush1.msra.mxu0 %v1192
        %1194 = vmatprep.subr.mxu0 0.0
        %v1195 = vand.u32 %v784, 4294901760
        %v1196 = vsub.f32 %v784, %v1195
        %v1197 = vand.u32 %v1196, 4294901760
        %1198 = vmatpush1.msra.mxu0 %v1197
        %1199 = vmatprep.subr.mxu0 0.0
        %1200 = vmatpush1.msra.mxu0 0.0
        %1201 = vmatprep.subr.mxu0 0.0
        %1202 = vmatpush1.msra.mxu0 0.0
        %1203 = vmatprep.subr.mxu0 0.0
        %1204 = vmatpush1.msra.mxu0 0.0
        %1205 = vmatprep.subr.mxu0 0.0
        %1206 = vmatpush1.msra.mxu0 0.0
        %1207 = vmatprep.subr.mxu0 0.0
        %1208 = vmatpush1.msra.mxu0 0.0
        %1209 = vmatprep.subr.mxu0 0.0
        %1210 = vmatpush1.msra.mxu0 0.0
        %1211 = vmatprep.subr.mxu0 0.0
        %1212 = vmatpush1.msra.mxu0 0.0
        %1213 = vmatprep.subr.mxu0 0.0
        %1214 = vmatpush1.msra.mxu0 0.0
        %1215 = vmatprep.subr.mxu0 0.0
        %1216 = vmatpush1.msra.mxu0 0.0
        %1217 = vmatprep.subr.mxu0 0.0
        %1218 = vmatpush1.msra.mxu0 0.0
        %1219 = vmatprep.subr.mxu0 0.0
        %1220 = vmatpush1.msra.mxu0 0.0
        %1221 = vmatprep.subr.mxu0 0.0
        %1222 = vmatpush1.msra.mxu0 0.0
        %1223 = vmatprep.subr.mxu0 0.0
        %1224 = vmatpush1.msra.mxu0 0.0
        %1225 = vmatprep.subr.mxu0 0.0
        %1226 = vmatpush1.msra.mxu0 0.0
        %1227 = vmatprep.subr.mxu0 0.0
        %1228 = vmatpush1.msra.mxu0 0.0
        %1229 = vmatprep.subr.mxu0 0.0
        %1230 = vmatpush1.msra.mxu0 0.0
        %1231 = vmatprep.subr.mxu0 0.0
        %1232 = vmatpush1.msra.mxu0 0.0
        %1233 = vmatprep.subr.mxu0 0.0
        %1234 = vmatpush1.msra.mxu0 0.0
        %1235 = vmatprep.subr.mxu0 0.0
        %1236 = vmatpush1.msra.mxu0 0.0
        %1237 = vmatprep.subr.mxu0 0.0
        %1238 = vmatpush1.msra.mxu0 0.0
        %1239 = vmatprep.subr.mxu0 0.0
        %1240 = vmatpush1.msra.mxu0 0.0
        %1241 = vmatprep.subr.mxu0 0.0
        %1242 = vmatpush1.msra.mxu0 0.0
        %1243 = vmatprep.subr.mxu0 0.0
        %1244 = vmatpush1.msra.mxu0 0.0
        %1245 = vmatprep.subr.mxu0 0.0
        %1246 = vmatpush1.msra.mxu0 0.0
        %1247 = vmatprep.mubr.f32.mxu0 0.0
        %v1248 = vand.u32 %v794, 4294901760
        %1249 = vmatmul.mubr.f32.gmra.mrb[0].mxu0 %v1248
        %v1250 = vpop.f32.mrb[0].mxu0
        %v1251 = vadd.f32 %v1156, %v1250
        %v1252 = vpop.f32.mrb[0].mxu0
        %1253 = vdwg.mxu0
        %1254 = vmatprep.subr.mxu0 0.0
        %v1255 = vand.u32 %v777, 4294901760
        %1256 = vmatpush1.msra.mxu0 %v1255
        %1257 = vmatprep.subr.mxu0 0.0
        %v1258 = vand.u32 %v778, 4294901760
        %1259 = vmatpush1.msra.mxu0 %v1258
        %1260 = vmatprep.subr.mxu0 0.0
        %v1261 = vand.u32 %v779, 4294901760
        %1262 = vmatpush1.msra.mxu0 %v1261
        %1263 = vmatprep.subr.mxu0 0.0
        %v1264 = vand.u32 %v780, 4294901760
        %1265 = vmatpush1.msra.mxu0 %v1264
        %1266 = vmatprep.subr.mxu0 0.0
        %v1267 = vand.u32 %v781, 4294901760
        %1268 = vmatpush1.msra.mxu0 %v1267
        %1269 = vmatprep.subr.mxu0 0.0
        %v1270 = vand.u32 %v782, 4294901760
        %1271 = vmatpush1.msra.mxu0 %v1270
        %1272 = vmatprep.subr.mxu0 0.0
        %v1273 = vand.u32 %v783, 4294901760
        %1274 = vmatpush1.msra.mxu0 %v1273
        %1275 = vmatprep.subr.mxu0 0.0
        %v1276 = vand.u32 %v784, 4294901760
        %1277 = vmatpush1.msra.mxu0 %v1276
        %1278 = vmatprep.subr.mxu0 0.0
        %1279 = vmatpush1.msra.mxu0 0.0
        %1280 = vmatprep.subr.mxu0 0.0
        %1281 = vmatpush1.msra.mxu0 0.0
        %1282 = vmatprep.subr.mxu0 0.0
        %1283 = vmatpush1.msra.mxu0 0.0
        %1284 = vmatprep.subr.mxu0 0.0
        %1285 = vmatpush1.msra.mxu0 0.0
        %1286 = vmatprep.subr.mxu0 0.0
        %1287 = vmatpush1.msra.mxu0 0.0
        %1288 = vmatprep.subr.mxu0 0.0
        %1289 = vmatpush1.msra.mxu0 0.0
        %1290 = vmatprep.subr.mxu0 0.0
        %1291 = vmatpush1.msra.mxu0 0.0
        %1292 = vmatprep.subr.mxu0 0.0
        %1293 = vmatpush1.msra.mxu0 0.0
        %1294 = vmatprep.subr.mxu0 0.0
        %1295 = vmatpush1.msra.mxu0 0.0
        %1296 = vmatprep.subr.mxu0 0.0
        %1297 = vmatpush1.msra.mxu0 0.0
        %1298 = vmatprep.subr.mxu0 0.0
        %1299 = vmatpush1.msra.mxu0 0.0
        %1300 = vmatprep.subr.mxu0 0.0
        %1301 = vmatpush1.msra.mxu0 0.0
        %1302 = vmatprep.subr.mxu0 0.0
        %1303 = vmatpush1.msra.mxu0 0.0
        %1304 = vmatprep.subr.mxu0 0.0
        %1305 = vmatpush1.msra.mxu0 0.0
        %1306 = vmatprep.subr.mxu0 0.0
        %1307 = vmatpush1.msra.mxu0 0.0
        %1308 = vmatprep.subr.mxu0 0.0
        %1309 = vmatpush1.msra.mxu0 0.0
        %1310 = vmatprep.subr.mxu0 0.0
        %1311 = vmatpush1.msra.mxu0 0.0
        %1312 = vmatprep.subr.mxu0 0.0
        %1313 = vmatpush1.msra.mxu0 0.0
        %1314 = vmatprep.subr.mxu0 0.0
        %1315 = vmatpush1.msra.mxu0 0.0
        %1316 = vmatprep.subr.mxu0 0.0
        %1317 = vmatpush1.msra.mxu0 0.0
        %1318 = vmatprep.subr.mxu0 0.0
        %1319 = vmatpush1.msra.mxu0 0.0
        %1320 = vmatprep.subr.mxu0 0.0
        %1321 = vmatpush1.msra.mxu0 0.0
        %1322 = vmatprep.subr.mxu0 0.0
        %1323 = vmatpush1.msra.mxu0 0.0
        %1324 = vmatprep.subr.mxu0 0.0
        %1325 = vmatpush1.msra.mxu0 0.0
        %1326 = vmatprep.mubr.f32.mxu0 0.0
        %v1327 = vand.u32 %v794, 4294901760
        %1328 = vmatmul.mubr.f32.gmra.mrb[0].mxu0 %v1327
        %v1329 = vpop.f32.mrb[0].mxu0
        %v1330 = vadd.f32 %v1251, %v1329
        %v1331 = vpop.f32.mrb[0].mxu0
        %1332 = vdwg.mxu0
        %v1333 = vld [vmem:[%s5] sm:$0x1]
        %v1335 = vlaneseq
        %v1336 = vshrl.u32 %v1335, 7
        %v1337 = vsub.s32 0, %v1336
        %v1338 = vrot.slane %v1333, %v1337
        %v1340 = vmul.f32 %v776, %v1338
        %v1341 = vsel %vm792, %v1340, 0.0
        %1342 = vadd.xlane.f32.xlu0 %v1341
        %v1343 = vpop.xlane.xlu0 %1342
        %s1344 = sld [smem:[#allocation2]]
        %v1345 = vstv %s1344
        %v1346 = vadd.f32 %v1343, %v1345
        %v1347 = vsub.f32 0.0, %v1346
        %v1348 = vmul.f32 %v1347, 1.442695
        %v1349 = vpow.pop %v1348
        %v1350 = vadd.f32 %v1349, 1.0
        %v1351 = vrcp.pop %v1350
        %v1352 = vmul.f32 1.0, %v1351
        %v1353 = vmul.f32 %v1352, %v1330
        %1354 = vst.msk [vmem:[%s270] sm:$0xff] %vm287, %v1353
        %s1355 = sand.u32 %s182, 1
        %s1356 = scalar_lea.sflag [#allocation4], %s1355
        %s1357 = sand.u32 %s182, 1
        %s1358 = smul.addr %s1357, 8
        %s1359 = scalar_lea.vmem [#allocation3], %s1358
        // Predicated region
        $region49: #{tpu_custom_call.1} parent=47 // pred_check
          %p1360 = pneg %p192
        $region50: #{tpu_custom_call.1} parent=47 // pred_check_branch
          %1362 = sbr.rel (%p1360) target = $region52
        $region51: #{tpu_custom_call.1} parent=47 // pred_region
          %s1364 = ssub.s32 128, 128
          %1365 = vsyncadd %s1356, %s1364
          %s1366 = smul.addr %s22, 128
          %s1367 = scalar_lea.hbm %s7, %s1366
          %s1369 = sshll.u32 %s1359, 4
          %s1370 = int_to_ptr.vmem [resolvable:$true] %s1369
          %1372 = dma.vmem_to_hbm [thread:$0]  %s1370, 128, %s1367, %s1356
        $region52: #{tpu_custom_call.1} parent=47 // pred_fallthru
          _
      $region48: #{tpu_custom_call.1} parent=5 // pred_fallthru
        _
      %p1373 = scmp.le.s32.totalorder 2, %s17
      // Predicated region
      $region53: #{tpu_custom_call.1} parent=5 // pred_check
        %p1374 = pneg %p1373
      $region54: #{tpu_custom_call.1} parent=5 // pred_check_branch
        %1376 = sbr.rel (%p1374) target = $region56
      $region55: #{tpu_custom_call.1} parent=5 // pred_region
        %s1377 = ssub.s32 %s17, 2
        // Predicated region
        $region57: #{tpu_custom_call.1} parent=55 // pred_check
          %p1378 = pneg %p198
        $region58: #{tpu_custom_call.1} parent=55 // pred_check_branch
          %1380 = sbr.rel (%p1378) target = $region60
        $region59: #{tpu_custom_call.1} parent=55 // pred_region
          %s1381 = sand.u32 %s183, 1
          %s1382 = scalar_lea.sflag [#allocation4], %s1381
          %s1383 = sand.u32 %s183, 1
          %s1384 = smul.addr %s1383, 8
          %s1385 = scalar_lea.vmem [#allocation3], %s1384
          %1386 = dma.done %s1382, 128
        $region60: #{tpu_custom_call.1} parent=55 // pred_fallthru
          _
      $region56: #{tpu_custom_call.1} parent=5 // pred_fallthru
        _
    $region6: #{tpu_custom_call.1} parent=1 // loop_footer
      %s21 = sadd.s32 1, %s17
    $region7: #{tpu_custom_call.1} parent=1 // loop_footer_branch
      %16 = sbr.rel target = $region3
    $region8: #{tpu_custom_call.1} parent=1 // loop_exit
      _
    %1387 = vsyncpa [#allocation4], 1
    %s1388 = scalar_lea.sflag [#allocation4], 1
    %1389 = vsyncpa %s1388, 1

</llo_original>
